<compile_context>
chip_gen: v7x
topology: tpu7x:2x2x1
jax: 0.10.0
libtpu: 0.0.40
codegen_flags: <defaults>
</compile_context>

<pallas_src>
import jax
import jax.numpy as jnp
from jax import lax
from jax.experimental import pallas as pl
from jax.experimental.pallas import tpu as pltpu

block_size = 128
n_embd = 384
head_size = 128          # lane-aligned head dim (multiple of 128)


# ---------------------------------------------------------------------------
# One-time (load-time) weight preparation
# ---------------------------------------------------------------------------
def pack_qkv_weights(wq, wk, wv):
    """Fold the attention scale into Wq, stack [Wq|Wk|Wv] -> (C, 3*hs), bf16.

    Done once at weight-load time so the kernel sees a resident, pre-scaled
    bf16 operand: half the DMA bytes, zero per-step casts, no per-step
    `* scale` pass over the (T, T) logits.
    """
    scale = jnp.float32(head_size) ** jnp.float32(-0.5)
    wqkv = jnp.concatenate([wq * scale, wk, wv], axis=-1)       # (C, 3*hs) f32
    return wqkv.astype(jnp.bfloat16)


# ---------------------------------------------------------------------------
# Fused kernel: QKV projection + causal softmax attention for one batch row
# ---------------------------------------------------------------------------
def head_kernel(x_ref, wqkv_ref, o_ref):
    x = x_ref[0]                                  # (T, C) bf16 — no cast
    w = wqkv_ref[...]                             # (C, 3*hs) bf16 resident block

    # One wide matmul computes Q (pre-scaled), K, V together (fills the MXU).
    qkv = jnp.dot(x, w, preferred_element_type=jnp.float32)     # (T, 3*hs) f32 acc
    qkv = qkv.astype(jnp.bfloat16)                # single downcast pass
    q = qkv[:, 0 * head_size:1 * head_size]
    k = qkv[:, 1 * head_size:2 * head_size]
    v = qkv[:, 2 * head_size:3 * head_size]

    T = q.shape[0]

    # q @ k^T without materializing a transpose: contract over the head dim.
    wei = lax.dot_general(
        q, k,
        dimension_numbers=(((1,), (1,)), ((), ())),
        preferred_element_type=jnp.float32)                      # (T, T) f32

    # Causal mask: positions above the diagonal -> -inf.
    # (Safe: the diagonal guarantees >=1 unmasked entry per row.)
    row = lax.broadcasted_iota(jnp.int32, (T, T), 0)
    col = lax.broadcasted_iota(jnp.int32, (T, T), 1)
    wei = jnp.where(col <= row, wei, jnp.float32(-jnp.inf))

    # Numerically stable softmax; statistics stay in f32 (required on v5e).
    wei_max = jnp.max(wei, axis=-1, keepdims=True)
    p = jnp.exp(wei - wei_max)
    denom = jnp.sum(p, axis=-1, keepdims=True)
    # Normalization fused with the bf16 downcast: one pass over the (T,T) tile.
    # NOTE: approx reciprocal (EUP) -> rows sum to 1 only within ~1e-3.
    p = (p * pl.reciprocal(denom, approx=True)).astype(jnp.bfloat16)

    # TODO(synk): training-mode dropout(p) skipped (eval-mode identity).

    out = jnp.dot(p, v, preferred_element_type=jnp.float32)      # (T, hs) f32
    o_ref[0] = out.astype(o_ref.dtype)


def head_forward(x, wqkv):
    """x: (B, T, C) any float dtype; wqkv: bf16 (C, 3*head_size) from
    pack_qkv_weights().  Returns (B, T, head_size) f32."""
    B, T, C = x.shape
    assert C == n_embd and T <= block_size
    assert wqkv.shape == (C, 3 * head_size) and wqkv.dtype == jnp.bfloat16

    # In a bf16 model this is a no-op; it halves the kernel's x DMA bytes.
    x = x.astype(jnp.bfloat16)

    return pl.pallas_call(
        head_kernel,
        out_shape=jax.ShapeDtypeStruct((B, T, head_size), jnp.float32),
        grid_spec=pltpu.PrefetchScalarGridSpec(
            num_scalar_prefetch=0,
            grid=(B,),
            in_specs=[
                pl.BlockSpec((1, T, C), lambda b: (b, 0, 0)),
                # Constant block index -> weight stays resident, no re-DMA.
                pl.BlockSpec((C, 3 * head_size), lambda b: (0, 0)),
            ],
            out_specs=pl.BlockSpec((1, T, head_size), lambda b: (b, 0, 0)),
        ),
        compiler_params=pltpu.CompilerParams(
            dimension_semantics=("parallel",)),
    )(x, wqkv)


# ---------------------------------------------------------------------------
# Pure-JAX f32 reference (eval-mode semantics, matches the PyTorch forward)
# ---------------------------------------------------------------------------
def reference(x, wq, wk, wv):
    T = x.shape[1]
    q = x @ wq
    k = x @ wk
    v = x @ wv
    wei = (q @ jnp.swapaxes(k, -2, -1)) * (head_size ** -0.5)
    mask = jnp.tril(jnp.ones((T, T), dtype=bool))
    wei = jnp.where(mask, wei, -jnp.inf)
    wei = jax.nn.softmax(wei, axis=-1)
    return wei @ v


if __name__ == "__main__":
    key = jax.random.PRNGKey(0)
    kx, kq, kk, kv = jax.random.split(key, 4)

    B, T = 2, 128
    scale_in = (1.0 / n_embd) ** 0.5

    x = jax.random.normal(kx, (B, T, n_embd), dtype=jnp.float32)
    wq = jax.random.uniform(kq, (n_embd, head_size),
                            minval=-scale_in, maxval=scale_in, dtype=jnp.float32)
    wk = jax.random.uniform(kk, (n_embd, head_size),
                            minval=-scale_in, maxval=scale_in, dtype=jnp.float32)
    wv = jax.random.uniform(kv, (n_embd, head_size),
                            minval=-scale_in, maxval=scale_in, dtype=jnp.float32)

    # Load-time weight packing (done once, outside the kernel / per-call path).
    wqkv = pack_qkv_weights(wq, wk, wv)

    out = head_forward(x, wqkv)
    out = jax.block_until_ready(out)

    ref = reference(x, wq, wk, wv)
    assert out.shape == (B, T, head_size)
    # Tolerance relaxed (2e-2) because activations/weights feed the MXU in
    # bf16 and the softmax denominator uses an approx reciprocal; softmax
    # statistics and all matmul accumulation remain f32 (observed error ~1e-3).
    assert jnp.allclose(out, ref, atol=2e-2, rtol=2e-2), "mismatch vs reference"

    print("KERNEL_OK")
</pallas_src>

<mosaic_0001>
module attributes {stable_mosaic.version = 11 : i64} {
  func.func @head_kernel(%arg0: i32, %arg1: memref<1x128x384xbf16, #tpu.memory_space<vmem>>, %arg2: memref<384x384xbf16, #tpu.memory_space<vmem>>, %arg3: memref<1x128x128xf32, #tpu.memory_space<vmem>>) attributes {dimension_semantics = [#tpu.dimension_semantics<parallel>], iteration_bounds = array<i64: 2>, scalar_prefetch = 0 : i64, scratch_operands = 0 : i64, tpu.core_type = #tpu.core_type<tc>, window_params = [{transform_indices = @transform_0, window_bounds = array<i64: 1, 128, 384>}, {pipeline_mode = #tpu.pipeline_mode<synchronous>, transform_indices = @transform_1, window_bounds = array<i64: 384, 384>}, {transform_indices = @transform_2, window_bounds = array<i64: 1, 128, 128>}]} {
    %c0 = arith.constant 0 : index
    %c0_0 = arith.constant 0 : index
    %c0_1 = arith.constant 0 : index
    %0 = vector.load %arg1[%c0, %c0_0, %c0_1] : memref<1x128x384xbf16, #tpu.memory_space<vmem>>, vector<1x128x384xbf16>
    %1 = vector.shape_cast %0 : vector<1x128x384xbf16> to vector<128x384xbf16>
    %c0_2 = arith.constant 0 : index
    %c0_3 = arith.constant 0 : index
    %2 = vector.load %arg2[%c0_2, %c0_3] : memref<384x384xbf16, #tpu.memory_space<vmem>>, vector<384x384xbf16>
    %cst = arith.constant dense<0.000000e+00> : vector<128x384xf32>
    %3 = tpu.matmul %1, %2, %cst {dimension_numbers = #tpu.dot_dimension_numbers<[1], [0], [0], [1], [0, 0, 1, 1], [], []>} : vector<128x384xbf16>, vector<384x384xbf16>, vector<128x384xf32> -> vector<128x384xf32>
    %4 = arith.truncf %3 : vector<128x384xf32> to vector<128x384xbf16>
    %5 = vector.extract_strided_slice %4 {offsets = [0, 0], sizes = [128, 128], strides = [1, 1]} : vector<128x384xbf16> to vector<128x128xbf16>
    %6 = vector.extract_strided_slice %4 {offsets = [0, 128], sizes = [128, 128], strides = [1, 1]} : vector<128x384xbf16> to vector<128x128xbf16>
    %7 = vector.extract_strided_slice %4 {offsets = [0, 256], sizes = [128, 128], strides = [1, 1]} : vector<128x384xbf16> to vector<128x128xbf16>
    %cst_4 = arith.constant dense<0.000000e+00> : vector<128x128xf32>
    %8 = tpu.matmul %5, %6, %cst_4 {dimension_numbers = #tpu.dot_dimension_numbers<[1], [1], [0], [0], [0, 0, 1, 0], [], []>} : vector<128x128xbf16>, vector<128x128xbf16>, vector<128x128xf32> -> vector<128x128xf32>
    %9 = tpu.iota {dimensions = array<i32: 0>} : vector<128x128xi32>
    %10 = tpu.iota {dimensions = array<i32: 1>} : vector<128x128xi32>
    %11 = arith.cmpi sle, %10, %9 : vector<128x128xi32>
    %cst_5 = arith.constant 0xFF800000 : f32
    %12 = vector.broadcast %cst_5 : f32 to vector<128x128xf32>
    %13 = arith.select %11, %8, %12 : vector<128x128xi1>, vector<128x128xf32>
    %cst_6 = arith.constant dense<0xFF800000> : vector<128xf32>
    %14 = vector.multi_reduction <maximumf>, %13, %cst_6 [1] : vector<128x128xf32> to vector<128xf32>
    %15 = vector.shape_cast %14 : vector<128xf32> to vector<128x1xf32>
    %16 = vector.broadcast %15 : vector<128x1xf32> to vector<128x128xf32>
    %17 = arith.subf %13, %16 : vector<128x128xf32>
    %18 = math.exp %17 : vector<128x128xf32>
    %cst_7 = arith.constant dense<0.000000e+00> : vector<128xf32>
    %19 = vector.multi_reduction <add>, %18, %cst_7 [1] : vector<128x128xf32> to vector<128xf32>
    %20 = vector.shape_cast %19 : vector<128xf32> to vector<128x1xf32>
    %21 = tpu.reciprocal %20 {approx = true} : vector<128x1xf32> -> vector<128x1xf32>
    %22 = vector.broadcast %21 : vector<128x1xf32> to vector<128x128xf32>
    %23 = arith.mulf %18, %22 : vector<128x128xf32>
    %24 = arith.truncf %23 : vector<128x128xf32> to vector<128x128xbf16>
    %cst_8 = arith.constant dense<0.000000e+00> : vector<128x128xf32>
    %25 = tpu.matmul %24, %7, %cst_8 {dimension_numbers = #tpu.dot_dimension_numbers<[1], [0], [0], [1], [0, 0, 1, 1], [], []>} : vector<128x128xbf16>, vector<128x128xbf16>, vector<128x128xf32> -> vector<128x128xf32>
    %c0_9 = arith.constant 0 : index
    %c0_10 = arith.constant 0 : index
    %c0_11 = arith.constant 0 : index
    %26 = vector.load %arg3[%c0_9, %c0_10, %c0_11] : memref<1x128x128xf32, #tpu.memory_space<vmem>>, vector<1x128x128xf32>
    %27 = vector.shape_cast %26 : vector<1x128x128xf32> to vector<128x128xf32>
    %28 = vector.shape_cast %25 : vector<128x128xf32> to vector<1x128x128xf32>
    tpu.vector_store %arg3[%c0_9, %c0_10, %c0_11], %28 {strides = array<i32>} : memref<1x128x128xf32, #tpu.memory_space<vmem>>, vector<1x128x128xf32>,
    return
  }
  func.func @transform_0(%arg0: i32) -> (i32, i32, i32) {
    %c0_i32 = arith.constant 0 : i32
    %c0_i32_0 = arith.constant 0 : i32
    %c0_i32_1 = arith.constant 0 : i32
    return %arg0, %c0_i32, %c0_i32_0 : i32, i32, i32
  }
  func.func @transform_1(%arg0: i32) -> (i32, i32) {
    %c0_i32 = arith.constant 0 : i32
    %c0_i32_0 = arith.constant 0 : i32
    %c0_i32_1 = arith.constant 0 : i32
    return %c0_i32, %c0_i32_0 : i32, i32
  }
  func.func @transform_2(%arg0: i32) -> (i32, i32, i32) {
    %c0_i32 = arith.constant 0 : i32
    %c0_i32_0 = arith.constant 0 : i32
    %c0_i32_1 = arith.constant 0 : i32
    return %arg0, %c0_i32, %c0_i32_0 : i32, i32, i32
  }
}

</mosaic_0001>

<llo_original>
// kernel: tpu_custom_call.1
$region0: #{tpu_custom_call.1}
  #allocation0 [shape = 'u32[]', space=smem, size = 0x4, offset = 0x4, fixed_abs, tag = 'smem constant byte address 0x4 - core index']
  #allocation1 [shape = 'u32[144,128]{1,0:T(1,128)}', space=vmem, size = 0x12000, scoped, tag = 'internal scratch']
  %s0 = inlined_call_operand.hbm [shape: bf16[2,128,384], index: 0, kind: input, shape index: {}]
  %s1 = inlined_call_operand.hbm [shape: bf16[384,384], index: 1, kind: input, shape index: {}]
  %s2 = inlined_call_operand.hbm [shape: f32[2,128,128], index: 2, kind: output, shape index: {}]
  %s3 = sld [smem:[#allocation0]]
  $region49: #{tpu_custom_call.1} parent=0
    _
  %s5 = ssub.s32 1, %s3
  %s6 = scalar_select 0, %s5, %s3
  $region1: #{tpu_custom_call.1} parent=0
    #allocation2 [shape = 'u8[196608]{0}', space=vmem, size = 0x30000, scoped, tag = 'input window, operand 0']
    #allocation3 [shape = 's32[2]{0}', space=sflag, size = 0x8, scoped, tag = 'scoped memory for tpu_custom_call.1']
    #allocation4 [shape = 's32[2]{0}', space=sflag, size = 0x8, scoped, tag = 'scoped memory for tpu_custom_call.1']
    #allocation5 [shape = 'u8[294912]{0}', space=vmem, size = 0x48000, scoped, tag = 'input window, operand 1, single buffered']
    #allocation6 [shape = 's32[1]{0}', space=sflag, size = 0x4, scoped, tag = 'scoped memory for tpu_custom_call.1']
    #allocation7 [shape = 'u8[131072]{0}', space=vmem, size = 0x20000, scoped, tag = 'output window, operand 0']
    %7 = vsyncpa [#allocation3], 0
    %s8 = scalar_lea.sflag [#allocation3], 1
    %9 = vsyncpa %s8, 0
    %10 = vsyncpa [#allocation6], 0
    %11 = vsyncpa [#allocation4], 0
    %s12 = scalar_lea.sflag [#allocation4], 1
    %13 = vsyncpa %s12, 0
    loop: start=0, step=1, limit=4
    $region2: #{tpu_custom_call.1} parent=1 // loop_pre_header
      _
    $region3: #{tpu_custom_call.1} parent=1 // loop_header
      %s15 = sphi 0, %s19
      %p16 = scmp.ge.s32.totalorder %s15, 4
      %s25 = sphi 0, %s27
      %s28 = sphi 0, %s25
      %s29 = sphi 0, %s28
      %s45 = sphi 0, %s29
      %s49 = sphi 0, %s49
      %s51 = sphi 0, %s49
      %s52 = sphi 0, %s51
      %s66 = sphi 0, %s52
      %s72 = sphi 0, %s74
      %s75 = sphi 0, %s72
      %s76 = sphi 0, %s75
      %s92 = sphi 0, %s76
    $region4: #{tpu_custom_call.1} parent=1 // loop_header_branch
      %18 = sbr.rel (%p16) target = $region8
    $region5: #{tpu_custom_call.1} parent=1 // loop_body
      %s20 = ssub.s32 %s15, 1
      %s21 = ssub.s32 %s15, 2
      %s22 = sadd.s32 %s15, 1
      %s23 = ssub.s32 %s15, %s22
      %p24 = scmp.eq.s32.totalorder %s23, 0
      %s26 = sadd.s32 %s25, 1
      %s27 = scalar_select %p24, %s25, %s26
      %p30 = pneg %p24
      %p31 = scmp.eq.s32.totalorder %s15, 1
      %p32 = por %p30, %p31
      %p33 = scmp.ne.s32.totalorder %s25, %s28
      %p34 = scmp.eq.s32.totalorder %s15, 0
      %p35 = por %p33, %p34
      %p36 = scmp.ne.s32.totalorder %s25, %s28
      %p37 = scmp.eq.s32.totalorder %s20, 1
      %p38 = por %p36, %p37
      %p39 = scmp.ne.s32.totalorder %s28, %s29
      %p40 = scmp.eq.s32.totalorder %s20, 0
      %p41 = por %p39, %p40
      %p42 = scmp.ne.s32.totalorder %s28, %s29
      %p43 = scmp.eq.s32.totalorder %s21, 1
      %p44 = por %p42, %p43
      %p46 = scmp.ne.s32.totalorder %s29, %s45
      %p47 = scmp.eq.s32.totalorder %s21, 0
      %p48 = por %p46, %p47
      %s50 = sadd.s32 %s49, 1
      %p53 = scmp.eq.s32.totalorder %s15, 1
      %p54 = scmp.ne.s32.totalorder %s49, %s51
      %p55 = scmp.eq.s32.totalorder %s15, 0
      %p56 = por %p54, %p55
      %p57 = scmp.ne.s32.totalorder %s49, %s51
      %p58 = scmp.eq.s32.totalorder %s20, 1
      %p59 = por %p57, %p58
      %p60 = scmp.ne.s32.totalorder %s51, %s52
      %p61 = scmp.eq.s32.totalorder %s20, 0
      %p62 = por %p60, %p61
      %p63 = scmp.ne.s32.totalorder %s51, %s52
      %p64 = scmp.eq.s32.totalorder %s21, 1
      %p65 = por %p63, %p64
      %p67 = scmp.ne.s32.totalorder %s52, %s66
      %p68 = scmp.eq.s32.totalorder %s21, 0
      %p69 = por %p67, %p68
      %s70 = ssub.s32 %s15, %s22
      %p71 = scmp.eq.s32.totalorder %s70, 0
      %s73 = sadd.s32 %s72, 1
      %s74 = scalar_select %p71, %s72, %s73
      %p77 = pneg %p71
      %p78 = scmp.eq.s32.totalorder %s15, 1
      %p79 = por %p77, %p78
      %p80 = scmp.ne.s32.totalorder %s72, %s75
      %p81 = scmp.eq.s32.totalorder %s15, 0
      %p82 = por %p80, %p81
      %p83 = scmp.ne.s32.totalorder %s72, %s75
      %p84 = scmp.eq.s32.totalorder %s20, 1
      %p85 = por %p83, %p84
      %p86 = scmp.ne.s32.totalorder %s75, %s76
      %p87 = scmp.eq.s32.totalorder %s20, 0
      %p88 = por %p86, %p87
      %p89 = scmp.ne.s32.totalorder %s75, %s76
      %p90 = scmp.eq.s32.totalorder %s21, 1
      %p91 = por %p89, %p90
      %p93 = scmp.ne.s32.totalorder %s76, %s92
      %p94 = scmp.eq.s32.totalorder %s21, 0
      %p95 = por %p93, %p94
      %p96 = scmp.le.s32.totalorder 1, %s15
      %p97 = scmp.lt.s32.totalorder %s15, 3
      %p98 = pnand %p96, %p97
      %p99 = pneg %p98
      // Predicated region
      $region9: #{tpu_custom_call.1} parent=5 // pred_check
        _
      $region10: #{tpu_custom_call.1} parent=5 // pred_check_branch
        %101 = sbr.rel (%p98) target = $region12
      $region11: #{tpu_custom_call.1} parent=5 // pred_region
        %s102 = ssub.s32 %s15, 1
        // Predicated region
        $region13: #{tpu_custom_call.1} parent=11 // pred_check
          %p103 = pneg %p62
        $region14: #{tpu_custom_call.1} parent=11 // pred_check_branch
          %105 = sbr.rel (%p103) target = $region16
        $region15: #{tpu_custom_call.1} parent=11 // pred_region
          %s107 = ssub.s32 9216, 9216
          %108 = vsyncadd [#allocation6], %s107
          %s109 = sshll.u32 [#allocation5], 4
          %s110 = int_to_ptr.vmem [resolvable:$true] %s109
          %115 = dma.hbm_to_vmem [thread:$0]  %s1, 9216, %s110, [#allocation6], 192, 192, 12
        $region16: #{tpu_custom_call.1} parent=11 // pred_fallthru
          _
      $region12: #{tpu_custom_call.1} parent=5 // pred_fallthru
        _
      %p116 = scmp.lt.s32.totalorder %s15, 2
      // Predicated region
      $region17: #{tpu_custom_call.1} parent=5 // pred_check
        %p117 = pneg %p116
      $region18: #{tpu_custom_call.1} parent=5 // pred_check_branch
        %119 = sbr.rel (%p117) target = $region20
      $region19: #{tpu_custom_call.1} parent=5 // pred_region
        // Predicated region
        $region21: #{tpu_custom_call.1} parent=19 // pred_check
          %p120 = pneg %p35
        $region22: #{tpu_custom_call.1} parent=19 // pred_check_branch
          %122 = sbr.rel (%p120) target = $region24
        $region23: #{tpu_custom_call.1} parent=19 // pred_region
          %s123 = sand.u32 %s25, 1
          %s124 = scalar_lea.sflag [#allocation3], %s123
          %s125 = sand.u32 %s25, 1
          %s126 = smul.addr %s125, 192
          %s127 = scalar_lea.vmem [#allocation2], %s126
          %s129 = ssub.s32 3072, 3072
          %130 = vsyncadd %s124, %s129
          %s131 = smul.addr %s15, 48
          %s132 = smul.addr %s131, 64
          %s133 = scalar_lea.hbm %s0, %s132
          %s134 = sshll.u32 %s127, 4
          %s135 = int_to_ptr.vmem [resolvable:$true] %s134
          %140 = dma.hbm_to_vmem [thread:$0]  %s133, 3072, %s135, %s124, 192, 192, 12
        $region24: #{tpu_custom_call.1} parent=19 // pred_fallthru
          _
      $region20: #{tpu_custom_call.1} parent=5 // pred_fallthru
        _
      %p141 = scmp.le.s32.totalorder 1, %s15
      %p142 = scmp.lt.s32.totalorder %s15, 3
      %p143 = pnand %p141, %p142
      %p144 = pneg %p143
      // Predicated region
      $region25: #{tpu_custom_call.1} parent=5 // pred_check
        _
      $region26: #{tpu_custom_call.1} parent=5 // pred_check_branch
        %146 = sbr.rel (%p143) target = $region28
      $region27: #{tpu_custom_call.1} parent=5 // pred_region
        %s147 = ssub.s32 %s15, 1
        %s148 = sand.u32 %s28, 1
        %s149 = scalar_lea.sflag [#allocation3], %s148
        %s150 = sand.u32 %s28, 1
        %s151 = smul.addr %s150, 192
        %s152 = scalar_lea.vmem [#allocation2], %s151
        // Predicated region
        $region29: #{tpu_custom_call.1} parent=27 // pred_check
          %p153 = pneg %p41
        $region30: #{tpu_custom_call.1} parent=27 // pred_check_branch
          %155 = sbr.rel (%p153) target = $region32
        $region31: #{tpu_custom_call.1} parent=27 // pred_region
          %156 = dma.done %s149, 3072
        $region32: #{tpu_custom_call.1} parent=27 // pred_fallthru
          _
        // Predicated region
        $region33: #{tpu_custom_call.1} parent=27 // pred_check
          %p157 = pneg %p62
        $region34: #{tpu_custom_call.1} parent=27 // pred_check_branch
          %159 = sbr.rel (%p157) target = $region36
        $region35: #{tpu_custom_call.1} parent=27 // pred_region
          %160 = dma.done [#allocation6], 9216
        $region36: #{tpu_custom_call.1} parent=27 // pred_fallthru
          _
        %s161 = sand.u32 %s28, 1
        %s162 = scalar_lea.sflag [#allocation3], %s161
        %s163 = sand.u32 %s28, 1
        %s164 = smul.addr %s163, 192
        %s165 = scalar_lea.vmem [#allocation2], %s164
        %p166 = pneg %p41
        %p167 = pneg %p38
        %p168 = pneg %p62
        %p169 = pneg %p59
        %p170 = pneg %p88
        %p171 = pneg %p85
        %s172 = sand.u32 %s75, 1
        %s173 = scalar_lea.sflag [#allocation4], %s172
        %s174 = sand.u32 %s75, 1
        %s175 = smul.addr %s174, 128
        %s176 = scalar_lea.vmem [#allocation7], %s175
        %v178 = vld [vmem:[%s152] sm:$0xff]
        %v179 = vld [vmem:[%s152 + $0x8] sm:$0xf]
        %v180 = vld [vmem:[%s152 + $0xc] sm:$0xff]
        %v181 = vld [vmem:[%s152 + $0x14] sm:$0xf]
        %v182 = vld [vmem:[%s152 + $0x18] sm:$0xff]
        %v183 = vld [vmem:[%s152 + $0x20] sm:$0xf]
        %v184 = vld [vmem:[%s152 + $0x24] sm:$0xff]
        %v185 = vld [vmem:[%s152 + $0x2c] sm:$0xf]
        %v186 = vld [vmem:[%s152 + $0x30] sm:$0xff]
        %v187 = vld [vmem:[%s152 + $0x38] sm:$0xf]
        %v188 = vld [vmem:[%s152 + $0x3c] sm:$0xff]
        %v189 = vld [vmem:[%s152 + $0x44] sm:$0xf]
        %v190 = vld [vmem:[%s152 + $0x48] sm:$0xff]
        %v191 = vld [vmem:[%s152 + $0x50] sm:$0xf]
        %v192 = vld [vmem:[%s152 + $0x54] sm:$0xff]
        %v193 = vld [vmem:[%s152 + $0x5c] sm:$0xf]
        %v194 = vld [vmem:[%s152 + $0x60] sm:$0xff]
        %v195 = vld [vmem:[%s152 + $0x68] sm:$0xf]
        %v196 = vld [vmem:[%s152 + $0x6c] sm:$0xff]
        %v197 = vld [vmem:[%s152 + $0x74] sm:$0xf]
        %v198 = vld [vmem:[%s152 + $0x78] sm:$0xff]
        %v199 = vld [vmem:[%s152 + $0x80] sm:$0xf]
        %v200 = vld [vmem:[%s152 + $0x84] sm:$0xff]
        %v201 = vld [vmem:[%s152 + $0x8c] sm:$0xf]
        %v202 = vld [vmem:[%s152 + $0x90] sm:$0xff]
        %v203 = vld [vmem:[%s152 + $0x98] sm:$0xf]
        %v204 = vld [vmem:[%s152 + $0x9c] sm:$0xff]
        %v205 = vld [vmem:[%s152 + $0xa4] sm:$0xf]
        %v206 = vld [vmem:[%s152 + $0xa8] sm:$0xff]
        %v207 = vld [vmem:[%s152 + $0xb0] sm:$0xf]
        %v208 = vld [vmem:[%s152 + $0xb4] sm:$0xff]
        %v209 = vld [vmem:[%s152 + $0xbc] sm:$0xf]
        %v210 = vld [vmem:[#allocation5] sm:$0xff]
        %v211 = vld [vmem:[#allocation5 + $0x8] sm:$0xf]
        %v212 = vld [vmem:[#allocation5 + $0xc] sm:$0xff]
        %v213 = vld [vmem:[#allocation5 + $0x14] sm:$0xf]
        %v214 = vld [vmem:[#allocation5 + $0x18] sm:$0xff]
        %v215 = vld [vmem:[#allocation5 + $0x20] sm:$0xf]
        %v216 = vld [vmem:[#allocation5 + $0x24] sm:$0xff]
        %v217 = vld [vmem:[#allocation5 + $0x2c] sm:$0xf]
        %v218 = vld [vmem:[#allocation5 + $0x30] sm:$0xff]
        %v219 = vld [vmem:[#allocation5 + $0x38] sm:$0xf]
        %v220 = vld [vmem:[#allocation5 + $0x3c] sm:$0xff]
        %v221 = vld [vmem:[#allocation5 + $0x44] sm:$0xf]
        %v222 = vld [vmem:[#allocation5 + $0x48] sm:$0xff]
        %v223 = vld [vmem:[#allocation5 + $0x50] sm:$0xf]
        %v224 = vld [vmem:[#allocation5 + $0x54] sm:$0xff]
        %v225 = vld [vmem:[#allocation5 + $0x5c] sm:$0xf]
        %v226 = vld [vmem:[#allocation5 + $0x60] sm:$0xff]
        %v227 = vld [vmem:[#allocation5 + $0x68] sm:$0xf]
        %v228 = vld [vmem:[#allocation5 + $0x6c] sm:$0xff]
        %v229 = vld [vmem:[#allocation5 + $0x74] sm:$0xf]
        %v230 = vld [vmem:[#allocation5 + $0x78] sm:$0xff]
        %v231 = vld [vmem:[#allocation5 + $0x80] sm:$0xf]
        %v232 = vld [vmem:[#allocation5 + $0x84] sm:$0xff]
        %v233 = vld [vmem:[#allocation5 + $0x8c] sm:$0xf]
        %v234 = vld [vmem:[#allocation5 + $0x90] sm:$0xff]
        %v235 = vld [vmem:[#allocation5 + $0x98] sm:$0xf]
        %v236 = vld [vmem:[#allocation5 + $0x9c] sm:$0xff]
        %v237 = vld [vmem:[#allocation5 + $0xa4] sm:$0xf]
        %v238 = vld [vmem:[#allocation5 + $0xa8] sm:$0xff]
        %v239 = vld [vmem:[#allocation5 + $0xb0] sm:$0xf]
        %v240 = vld [vmem:[#allocation5 + $0xb4] sm:$0xff]
        %v241 = vld [vmem:[#allocation5 + $0xbc] sm:$0xf]
        %v242 = vld [vmem:[#allocation5 + $0xc0] sm:$0xff]
        %v243 = vld [vmem:[#allocation5 + $0xc8] sm:$0xf]
        %v244 = vld [vmem:[#allocation5 + $0xcc] sm:$0xff]
        %v245 = vld [vmem:[#allocation5 + $0xd4] sm:$0xf]
        %v246 = vld [vmem:[#allocation5 + $0xd8] sm:$0xff]
        %v247 = vld [vmem:[#allocation5 + $0xe0] sm:$0xf]
        %v248 = vld [vmem:[#allocation5 + $0xe4] sm:$0xff]
        %v249 = vld [vmem:[#allocation5 + $0xec] sm:$0xf]
        %v250 = vld [vmem:[#allocation5 + $0xf0] sm:$0xff]
        %v251 = vld [vmem:[#allocation5 + $0xf8] sm:$0xf]
        %v252 = vld [vmem:[#allocation5 + $0xfc] sm:$0xff]
        %v253 = vld [vmem:[#allocation5 + $0x104] sm:$0xf]
        %v254 = vld [vmem:[#allocation5 + $0x108] sm:$0xff]
        %v255 = vld [vmem:[#allocation5 + $0x110] sm:$0xf]
        %v256 = vld [vmem:[#allocation5 + $0x114] sm:$0xff]
        %v257 = vld [vmem:[#allocation5 + $0x11c] sm:$0xf]
        %v258 = vld [vmem:[#allocation5 + $0x120] sm:$0xff]
        %v259 = vld [vmem:[#allocation5 + $0x128] sm:$0xf]
        %v260 = vld [vmem:[#allocation5 + $0x12c] sm:$0xff]
        %v261 = vld [vmem:[#allocation5 + $0x134] sm:$0xf]
        %v262 = vld [vmem:[#allocation5 + $0x138] sm:$0xff]
        %v263 = vld [vmem:[#allocation5 + $0x140] sm:$0xf]
        %v264 = vld [vmem:[#allocation5 + $0x144] sm:$0xff]
        %v265 = vld [vmem:[#allocation5 + $0x14c] sm:$0xf]
        %v266 = vld [vmem:[#allocation5 + $0x150] sm:$0xff]
        %v267 = vld [vmem:[#allocation5 + $0x158] sm:$0xf]
        %v268 = vld [vmem:[#allocation5 + $0x15c] sm:$0xff]
        %v269 = vld [vmem:[#allocation5 + $0x164] sm:$0xf]
        %v270 = vld [vmem:[#allocation5 + $0x168] sm:$0xff]
        %v271 = vld [vmem:[#allocation5 + $0x170] sm:$0xf]
        %v272 = vld [vmem:[#allocation5 + $0x174] sm:$0xff]
        %v273 = vld [vmem:[#allocation5 + $0x17c] sm:$0xf]
        %v274 = vld [vmem:[#allocation5 + $0x180] sm:$0xff]
        %v275 = vld [vmem:[#allocation5 + $0x188] sm:$0xf]
        %v276 = vld [vmem:[#allocation5 + $0x18c] sm:$0xff]
        %v277 = vld [vmem:[#allocation5 + $0x194] sm:$0xf]
        %v278 = vld [vmem:[#allocation5 + $0x198] sm:$0xff]
        %v279 = vld [vmem:[#allocation5 + $0x1a0] sm:$0xf]
        %v280 = vld [vmem:[#allocation5 + $0x1a4] sm:$0xff]
        %v281 = vld [vmem:[#allocation5 + $0x1ac] sm:$0xf]
        %v282 = vld [vmem:[#allocation5 + $0x1b0] sm:$0xff]
        %v283 = vld [vmem:[#allocation5 + $0x1b8] sm:$0xf]
        %v284 = vld [vmem:[#allocation5 + $0x1bc] sm:$0xff]
        %v285 = vld [vmem:[#allocation5 + $0x1c4] sm:$0xf]
        %v286 = vld [vmem:[#allocation5 + $0x1c8] sm:$0xff]
        %v287 = vld [vmem:[#allocation5 + $0x1d0] sm:$0xf]
        %v288 = vld [vmem:[#allocation5 + $0x1d4] sm:$0xff]
        %v289 = vld [vmem:[#allocation5 + $0x1dc] sm:$0xf]
        %v290 = vld [vmem:[#allocation5 + $0x1e0] sm:$0xff]
        %v291 = vld [vmem:[#allocation5 + $0x1e8] sm:$0xf]
        %v292 = vld [vmem:[#allocation5 + $0x1ec] sm:$0xff]
        %v293 = vld [vmem:[#allocation5 + $0x1f4] sm:$0xf]
        %v294 = vld [vmem:[#allocation5 + $0x1f8] sm:$0xff]
        %v295 = vld [vmem:[#allocation5 + $0x200] sm:$0xf]
        %v296 = vld [vmem:[#allocation5 + $0x204] sm:$0xff]
        %v297 = vld [vmem:[#allocation5 + $0x20c] sm:$0xf]
        %v298 = vld [vmem:[#allocation5 + $0x210] sm:$0xff]
        %v299 = vld [vmem:[#allocation5 + $0x218] sm:$0xf]
        %v300 = vld [vmem:[#allocation5 + $0x21c] sm:$0xff]
        %v301 = vld [vmem:[#allocation5 + $0x224] sm:$0xf]
        %v302 = vld [vmem:[#allocation5 + $0x228] sm:$0xff]
        %v303 = vld [vmem:[#allocation5 + $0x230] sm:$0xf]
        %v304 = vld [vmem:[#allocation5 + $0x234] sm:$0xff]
        %v305 = vld [vmem:[#allocation5 + $0x23c] sm:$0xf]
        %v338 = vunpack.c.l.b16 %v178
        %v339 = vunpack.c.h.b16 %v178
        %v340 = vunpack.c.l.b16 %v179
        %v341 = vunpack.c.l.b16 %v180
        %v342 = vunpack.c.h.b16 %v180
        %v343 = vunpack.c.l.b16 %v181
        %v344 = vunpack.c.l.b16 %v182
        %v345 = vunpack.c.h.b16 %v182
        %v346 = vunpack.c.l.b16 %v183
        %v347 = vunpack.c.l.b16 %v184
        %v348 = vunpack.c.h.b16 %v184
        %v349 = vunpack.c.l.b16 %v185
        %v350 = vunpack.c.l.b16 %v186
        %v351 = vunpack.c.h.b16 %v186
        %v352 = vunpack.c.l.b16 %v187
        %v353 = vunpack.c.l.b16 %v188
        %v354 = vunpack.c.h.b16 %v188
        %v355 = vunpack.c.l.b16 %v189
        %v356 = vunpack.c.l.b16 %v190
        %v357 = vunpack.c.h.b16 %v190
        %v358 = vunpack.c.l.b16 %v191
        %v359 = vunpack.c.l.b16 %v192
        %v360 = vunpack.c.h.b16 %v192
        %v361 = vunpack.c.l.b16 %v193
        %v362 = vunpack.c.l.b16 %v194
        %v363 = vunpack.c.h.b16 %v194
        %v364 = vunpack.c.l.b16 %v195
        %v365 = vunpack.c.l.b16 %v196
        %v366 = vunpack.c.h.b16 %v196
        %v367 = vunpack.c.l.b16 %v197
        %v368 = vunpack.c.l.b16 %v198
        %v369 = vunpack.c.h.b16 %v198
        %v370 = vunpack.c.l.b16 %v199
        %v371 = vunpack.c.l.b16 %v200
        %v372 = vunpack.c.h.b16 %v200
        %v373 = vunpack.c.l.b16 %v201
        %v374 = vunpack.c.l.b16 %v202
        %v375 = vunpack.c.h.b16 %v202
        %v376 = vunpack.c.l.b16 %v203
        %v377 = vunpack.c.l.b16 %v204
        %v378 = vunpack.c.h.b16 %v204
        %v379 = vunpack.c.l.b16 %v205
        %v380 = vunpack.c.l.b16 %v206
        %v381 = vunpack.c.h.b16 %v206
        %v382 = vunpack.c.l.b16 %v207
        %v383 = vunpack.c.l.b16 %v208
        %v384 = vunpack.c.h.b16 %v208
        %v385 = vunpack.c.l.b16 %v209
        %v386 = vpack.c.b16 %v341, %v338
        %v387 = vpack.c.b16 %v342, %v339
        %v388 = vpack.c.b16 %v343, %v340
        %v389 = vpack.c.b16 %v347, %v344
        %v390 = vpack.c.b16 %v348, %v345
        %v391 = vpack.c.b16 %v349, %v346
        %v392 = vpack.c.b16 %v353, %v350
        %v393 = vpack.c.b16 %v354, %v351
        %v394 = vpack.c.b16 %v355, %v352
        %v395 = vpack.c.b16 %v359, %v356
        %v396 = vpack.c.b16 %v360, %v357
        %v397 = vpack.c.b16 %v361, %v358
        %v398 = vpack.c.b16 %v365, %v362
        %v399 = vpack.c.b16 %v366, %v363
        %v400 = vpack.c.b16 %v367, %v364
        %v401 = vpack.c.b16 %v371, %v368
        %v402 = vpack.c.b16 %v372, %v369
        %v403 = vpack.c.b16 %v373, %v370
        %v404 = vpack.c.b16 %v377, %v374
        %v405 = vpack.c.b16 %v378, %v375
        %v406 = vpack.c.b16 %v379, %v376
        %v407 = vpack.c.b16 %v383, %v380
        %v408 = vpack.c.b16 %v384, %v381
        %v409 = vpack.c.b16 %v385, %v382
        %v530 = vunpack.c.l.b16 %v210
        %v531 = vunpack.c.h.b16 %v210
        %v532 = vunpack.c.l.b16 %v211
        %v533 = vunpack.c.l.b16 %v212
        %v534 = vunpack.c.h.b16 %v212
        %v535 = vunpack.c.l.b16 %v213
        %v536 = vunpack.c.l.b16 %v214
        %v537 = vunpack.c.h.b16 %v214
        %v538 = vunpack.c.l.b16 %v215
        %v539 = vunpack.c.l.b16 %v216
        %v540 = vunpack.c.h.b16 %v216
        %v541 = vunpack.c.l.b16 %v217
        %v542 = vunpack.c.l.b16 %v218
        %v543 = vunpack.c.h.b16 %v218
        %v544 = vunpack.c.l.b16 %v219
        %v545 = vunpack.c.l.b16 %v220
        %v546 = vunpack.c.h.b16 %v220
        %v547 = vunpack.c.l.b16 %v221
        %v548 = vunpack.c.l.b16 %v222
        %v549 = vunpack.c.h.b16 %v222
        %v550 = vunpack.c.l.b16 %v223
        %v551 = vunpack.c.l.b16 %v224
        %v552 = vunpack.c.h.b16 %v224
        %v553 = vunpack.c.l.b16 %v225
        %v554 = vunpack.c.l.b16 %v226
        %v555 = vunpack.c.h.b16 %v226
        %v556 = vunpack.c.l.b16 %v227
        %v557 = vunpack.c.l.b16 %v228
        %v558 = vunpack.c.h.b16 %v228
        %v559 = vunpack.c.l.b16 %v229
        %v560 = vunpack.c.l.b16 %v230
        %v561 = vunpack.c.h.b16 %v230
        %v562 = vunpack.c.l.b16 %v231
        %v563 = vunpack.c.l.b16 %v232
        %v564 = vunpack.c.h.b16 %v232
        %v565 = vunpack.c.l.b16 %v233
        %v566 = vunpack.c.l.b16 %v234
        %v567 = vunpack.c.h.b16 %v234
        %v568 = vunpack.c.l.b16 %v235
        %v569 = vunpack.c.l.b16 %v236
        %v570 = vunpack.c.h.b16 %v236
        %v571 = vunpack.c.l.b16 %v237
        %v572 = vunpack.c.l.b16 %v238
        %v573 = vunpack.c.h.b16 %v238
        %v574 = vunpack.c.l.b16 %v239
        %v575 = vunpack.c.l.b16 %v240
        %v576 = vunpack.c.h.b16 %v240
        %v577 = vunpack.c.l.b16 %v241
        %v578 = vunpack.c.l.b16 %v242
        %v579 = vunpack.c.h.b16 %v242
        %v580 = vunpack.c.l.b16 %v243
        %v581 = vunpack.c.l.b16 %v244
        %v582 = vunpack.c.h.b16 %v244
        %v583 = vunpack.c.l.b16 %v245
        %v584 = vunpack.c.l.b16 %v246
        %v585 = vunpack.c.h.b16 %v246
        %v586 = vunpack.c.l.b16 %v247
        %v587 = vunpack.c.l.b16 %v248
        %v588 = vunpack.c.h.b16 %v248
        %v589 = vunpack.c.l.b16 %v249
        %v590 = vunpack.c.l.b16 %v250
        %v591 = vunpack.c.h.b16 %v250
        %v592 = vunpack.c.l.b16 %v251
        %v593 = vunpack.c.l.b16 %v252
        %v594 = vunpack.c.h.b16 %v252
        %v595 = vunpack.c.l.b16 %v253
        %v596 = vunpack.c.l.b16 %v254
        %v597 = vunpack.c.h.b16 %v254
        %v598 = vunpack.c.l.b16 %v255
        %v599 = vunpack.c.l.b16 %v256
        %v600 = vunpack.c.h.b16 %v256
        %v601 = vunpack.c.l.b16 %v257
        %v602 = vunpack.c.l.b16 %v258
        %v603 = vunpack.c.h.b16 %v258
        %v604 = vunpack.c.l.b16 %v259
        %v605 = vunpack.c.l.b16 %v260
        %v606 = vunpack.c.h.b16 %v260
        %v607 = vunpack.c.l.b16 %v261
        %v608 = vunpack.c.l.b16 %v262
        %v609 = vunpack.c.h.b16 %v262
        %v610 = vunpack.c.l.b16 %v263
        %v611 = vunpack.c.l.b16 %v264
        %v612 = vunpack.c.h.b16 %v264
        %v613 = vunpack.c.l.b16 %v265
        %v614 = vunpack.c.l.b16 %v266
        %v615 = vunpack.c.h.b16 %v266
        %v616 = vunpack.c.l.b16 %v267
        %v617 = vunpack.c.l.b16 %v268
        %v618 = vunpack.c.h.b16 %v268
        %v619 = vunpack.c.l.b16 %v269
        %v620 = vunpack.c.l.b16 %v270
        %v621 = vunpack.c.h.b16 %v270
        %v622 = vunpack.c.l.b16 %v271
        %v623 = vunpack.c.l.b16 %v272
        %v624 = vunpack.c.h.b16 %v272
        %v625 = vunpack.c.l.b16 %v273
        %v626 = vunpack.c.l.b16 %v274
        %v627 = vunpack.c.h.b16 %v274
        %v628 = vunpack.c.l.b16 %v275
        %v629 = vunpack.c.l.b16 %v276
        %v630 = vunpack.c.h.b16 %v276
        %v631 = vunpack.c.l.b16 %v277
        %v632 = vunpack.c.l.b16 %v278
        %v633 = vunpack.c.h.b16 %v278
        %v634 = vunpack.c.l.b16 %v279
        %v635 = vunpack.c.l.b16 %v280
        %v636 = vunpack.c.h.b16 %v280
        %v637 = vunpack.c.l.b16 %v281
        %v638 = vunpack.c.l.b16 %v282
        %v639 = vunpack.c.h.b16 %v282
        %v640 = vunpack.c.l.b16 %v283
        %v641 = vunpack.c.l.b16 %v284
        %v642 = vunpack.c.h.b16 %v284
        %v643 = vunpack.c.l.b16 %v285
        %v644 = vunpack.c.l.b16 %v286
        %v645 = vunpack.c.h.b16 %v286
        %v646 = vunpack.c.l.b16 %v287
        %v647 = vunpack.c.l.b16 %v288
        %v648 = vunpack.c.h.b16 %v288
        %v649 = vunpack.c.l.b16 %v289
        %v650 = vunpack.c.l.b16 %v290
        %v651 = vunpack.c.h.b16 %v290
        %v652 = vunpack.c.l.b16 %v291
        %v653 = vunpack.c.l.b16 %v292
        %v654 = vunpack.c.h.b16 %v292
        %v655 = vunpack.c.l.b16 %v293
        %v656 = vunpack.c.l.b16 %v294
        %v657 = vunpack.c.h.b16 %v294
        %v658 = vunpack.c.l.b16 %v295
        %v659 = vunpack.c.l.b16 %v296
        %v660 = vunpack.c.h.b16 %v296
        %v661 = vunpack.c.l.b16 %v297
        %v662 = vunpack.c.l.b16 %v298
        %v663 = vunpack.c.h.b16 %v298
        %v664 = vunpack.c.l.b16 %v299
        %v665 = vunpack.c.l.b16 %v300
        %v666 = vunpack.c.h.b16 %v300
        %v667 = vunpack.c.l.b16 %v301
        %v668 = vunpack.c.l.b16 %v302
        %v669 = vunpack.c.h.b16 %v302
        %v670 = vunpack.c.l.b16 %v303
        %v671 = vunpack.c.l.b16 %v304
        %v672 = vunpack.c.h.b16 %v304
        %v673 = vunpack.c.l.b16 %v305
        %v674 = vpack.c.b16 %v533, %v530
        %v675 = vpack.c.b16 %v534, %v531
        %v676 = vpack.c.b16 %v535, %v532
        %v677 = vpack.c.b16 %v539, %v536
        %v678 = vpack.c.b16 %v540, %v537
        %v679 = vpack.c.b16 %v541, %v538
        %v680 = vpack.c.b16 %v545, %v542
        %v681 = vpack.c.b16 %v546, %v543
        %v682 = vpack.c.b16 %v547, %v544
        %v683 = vpack.c.b16 %v551, %v548
        %v684 = vpack.c.b16 %v552, %v549
        %v685 = vpack.c.b16 %v553, %v550
        %v686 = vpack.c.b16 %v557, %v554
        %v687 = vpack.c.b16 %v558, %v555
        %v688 = vpack.c.b16 %v559, %v556
        %v689 = vpack.c.b16 %v563, %v560
        %v690 = vpack.c.b16 %v564, %v561
        %v691 = vpack.c.b16 %v565, %v562
        %v692 = vpack.c.b16 %v569, %v566
        %v693 = vpack.c.b16 %v570, %v567
        %v694 = vpack.c.b16 %v571, %v568
        %v695 = vpack.c.b16 %v575, %v572
        %v696 = vpack.c.b16 %v576, %v573
        %v697 = vpack.c.b16 %v577, %v574
        %v698 = vpack.c.b16 %v581, %v578
        %v699 = vpack.c.b16 %v582, %v579
        %v700 = vpack.c.b16 %v583, %v580
        %v701 = vpack.c.b16 %v587, %v584
        %v702 = vpack.c.b16 %v588, %v585
        %v703 = vpack.c.b16 %v589, %v586
        %v704 = vpack.c.b16 %v593, %v590
        %v705 = vpack.c.b16 %v594, %v591
        %v706 = vpack.c.b16 %v595, %v592
        %v707 = vpack.c.b16 %v599, %v596
        %v708 = vpack.c.b16 %v600, %v597
        %v709 = vpack.c.b16 %v601, %v598
        %v710 = vpack.c.b16 %v605, %v602
        %v711 = vpack.c.b16 %v606, %v603
        %v712 = vpack.c.b16 %v607, %v604
        %v713 = vpack.c.b16 %v611, %v608
        %v714 = vpack.c.b16 %v612, %v609
        %v715 = vpack.c.b16 %v613, %v610
        %v716 = vpack.c.b16 %v617, %v614
        %v717 = vpack.c.b16 %v618, %v615
        %v718 = vpack.c.b16 %v619, %v616
        %v719 = vpack.c.b16 %v623, %v620
        %v720 = vpack.c.b16 %v624, %v621
        %v721 = vpack.c.b16 %v625, %v622
        %v722 = vpack.c.b16 %v629, %v626
        %v723 = vpack.c.b16 %v630, %v627
        %v724 = vpack.c.b16 %v631, %v628
        %v725 = vpack.c.b16 %v635, %v632
        %v726 = vpack.c.b16 %v636, %v633
        %v727 = vpack.c.b16 %v637, %v634
        %v728 = vpack.c.b16 %v641, %v638
        %v729 = vpack.c.b16 %v642, %v639
        %v730 = vpack.c.b16 %v643, %v640
        %v731 = vpack.c.b16 %v647, %v644
        %v732 = vpack.c.b16 %v648, %v645
        %v733 = vpack.c.b16 %v649, %v646
        %v734 = vpack.c.b16 %v653, %v650
        %v735 = vpack.c.b16 %v654, %v651
        %v736 = vpack.c.b16 %v655, %v652
        %v737 = vpack.c.b16 %v659, %v656
        %v738 = vpack.c.b16 %v660, %v657
        %v739 = vpack.c.b16 %v661, %v658
        %v740 = vpack.c.b16 %v665, %v662
        %v741 = vpack.c.b16 %v666, %v663
        %v742 = vpack.c.b16 %v667, %v664
        %v743 = vpack.c.b16 %v671, %v668
        %v744 = vpack.c.b16 %v672, %v669
        %v745 = vpack.c.b16 %v673, %v670
        %818 = vmatprep.subr.bf16.mxu0 %v675
        %819 = vmatpush1.bf16.msra.mxu0 %v674
        %820 = vmatprep.subr.bf16.mxu0 %v678
        %821 = vmatpush1.bf16.msra.mxu0 %v677
        %822 = vmatprep.subr.bf16.mxu0 %v681
        %823 = vmatpush1.bf16.msra.mxu0 %v680
        %824 = vmatprep.subr.bf16.mxu0 %v684
        %825 = vmatpush1.bf16.msra.mxu0 %v683
        %826 = vmatprep.subr.bf16.mxu0 %v687
        %827 = vmatpush1.bf16.msra.mxu0 %v686
        %828 = vmatprep.subr.bf16.mxu0 %v690
        %829 = vmatpush1.bf16.msra.mxu0 %v689
        %830 = vmatprep.subr.bf16.mxu0 %v693
        %831 = vmatpush1.bf16.msra.mxu0 %v692
        %832 = vmatprep.subr.bf16.mxu0 %v696
        %833 = vmatpush1.bf16.msra.mxu0 %v695
        %834 = vmatprep.subr.bf16.mxu0 %v699
        %835 = vmatpush1.bf16.msra.mxu0 %v698
        %836 = vmatprep.subr.bf16.mxu0 %v702
        %837 = vmatpush1.bf16.msra.mxu0 %v701
        %838 = vmatprep.subr.bf16.mxu0 %v705
        %839 = vmatpush1.bf16.msra.mxu0 %v704
        %840 = vmatprep.subr.bf16.mxu0 %v708
        %841 = vmatpush1.bf16.msra.mxu0 %v707
        %842 = vmatprep.subr.bf16.mxu0 %v711
        %843 = vmatpush1.bf16.msra.mxu0 %v710
        %844 = vmatprep.subr.bf16.mxu0 %v714
        %845 = vmatpush1.bf16.msra.mxu0 %v713
        %846 = vmatprep.subr.bf16.mxu0 %v717
        %847 = vmatpush1.bf16.msra.mxu0 %v716
        %848 = vmatprep.subr.bf16.mxu0 %v720
        %849 = vmatpush1.bf16.msra.mxu0 %v719
        %850 = vmatprep.mubr.bf16.mxu0 %v387
        %851 = vmatmul.mubr.bf16.gmra.mrb[0].mxu0 %v386
        %v852 = vpop.f32.mrb[0].mxu0
        %v853 = vadd.f32 0.0, %v852
        %v854 = vpop.f32.mrb[0].mxu0
        %v855 = vadd.f32 0.0, %v854
        %v856 = vpop.f32.mrb[0].mxu0
        %v857 = vadd.f32 0.0, %v856
        %v858 = vpop.f32.mrb[0].mxu0
        %v859 = vadd.f32 0.0, %v858
        %860 = vmatprep.mubr.bf16.mxu0 %v390
        %861 = vmatmul.mubr.bf16.gmra.mrb[0].mxu0 %v389
        %v862 = vpop.f32.mrb[0].mxu0
        %v863 = vadd.f32 0.0, %v862
        %v864 = vpop.f32.mrb[0].mxu0
        %v865 = vadd.f32 0.0, %v864
        %v866 = vpop.f32.mrb[0].mxu0
        %v867 = vadd.f32 0.0, %v866
        %v868 = vpop.f32.mrb[0].mxu0
        %v869 = vadd.f32 0.0, %v868
        %870 = vmatprep.mubr.bf16.mxu0 %v393
        %871 = vmatmul.mubr.bf16.gmra.mrb[0].mxu0 %v392
        %v872 = vpop.f32.mrb[0].mxu0
        %v873 = vadd.f32 0.0, %v872
        %v874 = vpop.f32.mrb[0].mxu0
        %v875 = vadd.f32 0.0, %v874
        %v876 = vpop.f32.mrb[0].mxu0
        %v877 = vadd.f32 0.0, %v876
        %v878 = vpop.f32.mrb[0].mxu0
        %v879 = vadd.f32 0.0, %v878
        %880 = vmatprep.mubr.bf16.mxu0 %v396
        %881 = vmatmul.mubr.bf16.gmra.mrb[0].mxu0 %v395
        %v882 = vpop.f32.mrb[0].mxu0
        %v883 = vadd.f32 0.0, %v882
        %v884 = vpop.f32.mrb[0].mxu0
        %v885 = vadd.f32 0.0, %v884
        %v886 = vpop.f32.mrb[0].mxu0
        %v887 = vadd.f32 0.0, %v886
        %v888 = vpop.f32.mrb[0].mxu0
        %v889 = vadd.f32 0.0, %v888
        %890 = vmatprep.mubr.bf16.mxu0 %v399
        %891 = vmatmul.mubr.bf16.gmra.mrb[0].mxu0 %v398
        %v892 = vpop.f32.mrb[0].mxu0
        %v893 = vadd.f32 0.0, %v892
        %v894 = vpop.f32.mrb[0].mxu0
        %v895 = vadd.f32 0.0, %v894
        %v896 = vpop.f32.mrb[0].mxu0
        %v897 = vadd.f32 0.0, %v896
        %v898 = vpop.f32.mrb[0].mxu0
        %v899 = vadd.f32 0.0, %v898
        %900 = vmatprep.mubr.bf16.mxu0 %v402
        %901 = vmatmul.mubr.bf16.gmra.mrb[0].mxu0 %v401
        %v902 = vpop.f32.mrb[0].mxu0
        %v903 = vadd.f32 0.0, %v902
        %v904 = vpop.f32.mrb[0].mxu0
        %v905 = vadd.f32 0.0, %v904
        %v906 = vpop.f32.mrb[0].mxu0
        %v907 = vadd.f32 0.0, %v906
        %v908 = vpop.f32.mrb[0].mxu0
        %v909 = vadd.f32 0.0, %v908
        %910 = vmatprep.mubr.bf16.mxu0 %v405
        %911 = vmatmul.mubr.bf16.gmra.mrb[0].mxu0 %v404
        %v912 = vpop.f32.mrb[0].mxu0
        %v913 = vadd.f32 0.0, %v912
        %v914 = vpop.f32.mrb[0].mxu0
        %v915 = vadd.f32 0.0, %v914
        %v916 = vpop.f32.mrb[0].mxu0
        %v917 = vadd.f32 0.0, %v916
        %v918 = vpop.f32.mrb[0].mxu0
        %v919 = vadd.f32 0.0, %v918
        %920 = vmatprep.mubr.bf16.mxu0 %v408
        %921 = vmatmul.mubr.bf16.gmra.mrb[0].mxu0 %v407
        %v922 = vpop.f32.mrb[0].mxu0
        %v923 = vadd.f32 0.0, %v922
        %v924 = vpop.f32.mrb[0].mxu0
        %v925 = vadd.f32 0.0, %v924
        %v926 = vpop.f32.mrb[0].mxu0
        %v927 = vadd.f32 0.0, %v926
        %v928 = vpop.f32.mrb[0].mxu0
        %v929 = vadd.f32 0.0, %v928
        %930 = vdwg.mxu0
        %931 = vmatprep.subr.bf16.mxu0 %v723
        %932 = vmatpush1.bf16.msra.mxu0 %v722
        %933 = vmatprep.subr.bf16.mxu0 %v726
        %934 = vmatpush1.bf16.msra.mxu0 %v725
        %935 = vmatprep.subr.bf16.mxu0 %v729
        %936 = vmatpush1.bf16.msra.mxu0 %v728
        %937 = vmatprep.subr.bf16.mxu0 %v732
        %938 = vmatpush1.bf16.msra.mxu0 %v731
        %939 = vmatprep.subr.bf16.mxu0 %v735
        %940 = vmatpush1.bf16.msra.mxu0 %v734
        %941 = vmatprep.subr.bf16.mxu0 %v738
        %942 = vmatpush1.bf16.msra.mxu0 %v737
        %943 = vmatprep.subr.bf16.mxu0 %v741
        %944 = vmatpush1.bf16.msra.mxu0 %v740
        %945 = vmatprep.subr.bf16.mxu0 %v744
        %946 = vmatpush1.bf16.msra.mxu0 %v743
        %947 = vmatprep.subr.bf16.mxu0 0
        %948 = vmatpush1.bf16.msra.mxu0 0
        %949 = vmatprep.subr.bf16.mxu0 0
        %950 = vmatpush1.bf16.msra.mxu0 0
        %951 = vmatprep.subr.bf16.mxu0 0
        %952 = vmatpush1.bf16.msra.mxu0 0
        %953 = vmatprep.subr.bf16.mxu0 0
        %954 = vmatpush1.bf16.msra.mxu0 0
        %955 = vmatprep.subr.bf16.mxu0 0
        %956 = vmatpush1.bf16.msra.mxu0 0
        %957 = vmatprep.subr.bf16.mxu0 0
        %958 = vmatpush1.bf16.msra.mxu0 0
        %959 = vmatprep.subr.bf16.mxu0 0
        %960 = vmatpush1.bf16.msra.mxu0 0
        %961 = vmatprep.subr.bf16.mxu0 0
        %962 = vmatpush1.bf16.msra.mxu0 0
        %963 = vmatprep.mubr.bf16.mxu0 0
        %964 = vmatmul.mubr.bf16.gmra.mrb[0].mxu0 %v388
        %v965 = vpop.f32.mrb[0].mxu0
        %v966 = vadd.f32 %v853, %v965
        %v967 = vpop.f32.mrb[0].mxu0
        %v968 = vadd.f32 %v855, %v967
        %v969 = vpop.f32.mrb[0].mxu0
        %v970 = vadd.f32 %v857, %v969
        %v971 = vpop.f32.mrb[0].mxu0
        %v972 = vadd.f32 %v859, %v971
        %973 = vmatprep.mubr.bf16.mxu0 0
        %974 = vmatmul.mubr.bf16.gmra.mrb[0].mxu0 %v391
        %v975 = vpop.f32.mrb[0].mxu0
        %v976 = vadd.f32 %v863, %v975
        %v977 = vpop.f32.mrb[0].mxu0
        %v978 = vadd.f32 %v865, %v977
        %v979 = vpop.f32.mrb[0].mxu0
        %v980 = vadd.f32 %v867, %v979
        %v981 = vpop.f32.mrb[0].mxu0
        %v982 = vadd.f32 %v869, %v981
        %983 = vmatprep.mubr.bf16.mxu0 0
        %984 = vmatmul.mubr.bf16.gmra.mrb[0].mxu0 %v394
        %v985 = vpop.f32.mrb[0].mxu0
        %v986 = vadd.f32 %v873, %v985
        %v987 = vpop.f32.mrb[0].mxu0
        %v988 = vadd.f32 %v875, %v987
        %v989 = vpop.f32.mrb[0].mxu0
        %v990 = vadd.f32 %v877, %v989
        %v991 = vpop.f32.mrb[0].mxu0
        %v992 = vadd.f32 %v879, %v991
        %993 = vmatprep.mubr.bf16.mxu0 0
        %994 = vmatmul.mubr.bf16.gmra.mrb[0].mxu0 %v397
        %v995 = vpop.f32.mrb[0].mxu0
        %v996 = vadd.f32 %v883, %v995
        %v997 = vpop.f32.mrb[0].mxu0
        %v998 = vadd.f32 %v885, %v997
        %v999 = vpop.f32.mrb[0].mxu0
        %v1000 = vadd.f32 %v887, %v999
        %v1001 = vpop.f32.mrb[0].mxu0
        %v1002 = vadd.f32 %v889, %v1001
        %1003 = vmatprep.mubr.bf16.mxu0 0
        %1004 = vmatmul.mubr.bf16.gmra.mrb[0].mxu0 %v400
        %v1005 = vpop.f32.mrb[0].mxu0
        %v1006 = vadd.f32 %v893, %v1005
        %v1007 = vpop.f32.mrb[0].mxu0
        %v1008 = vadd.f32 %v895, %v1007
        %v1009 = vpop.f32.mrb[0].mxu0
        %v1010 = vadd.f32 %v897, %v1009
        %v1011 = vpop.f32.mrb[0].mxu0
        %v1012 = vadd.f32 %v899, %v1011
        %1013 = vmatprep.mubr.bf16.mxu0 0
        %1014 = vmatmul.mubr.bf16.gmra.mrb[0].mxu0 %v403
        %v1015 = vpop.f32.mrb[0].mxu0
        %v1016 = vadd.f32 %v903, %v1015
        %v1017 = vpop.f32.mrb[0].mxu0
        %v1018 = vadd.f32 %v905, %v1017
        %v1019 = vpop.f32.mrb[0].mxu0
        %v1020 = vadd.f32 %v907, %v1019
        %v1021 = vpop.f32.mrb[0].mxu0
        %v1022 = vadd.f32 %v909, %v1021
        %1023 = vmatprep.mubr.bf16.mxu0 0
        %1024 = vmatmul.mubr.bf16.gmra.mrb[0].mxu0 %v406
        %v1025 = vpop.f32.mrb[0].mxu0
        %v1026 = vadd.f32 %v913, %v1025
        %v1027 = vpop.f32.mrb[0].mxu0
        %v1028 = vadd.f32 %v915, %v1027
        %v1029 = vpop.f32.mrb[0].mxu0
        %v1030 = vadd.f32 %v917, %v1029
        %v1031 = vpop.f32.mrb[0].mxu0
        %v1032 = vadd.f32 %v919, %v1031
        %1033 = vmatprep.mubr.bf16.mxu0 0
        %1034 = vmatmul.mubr.bf16.gmra.mrb[0].mxu0 %v409
        %v1035 = vpop.f32.mrb[0].mxu0
        %v1036 = vadd.f32 %v923, %v1035
        %v1037 = vpop.f32.mrb[0].mxu0
        %v1038 = vadd.f32 %v925, %v1037
        %v1039 = vpop.f32.mrb[0].mxu0
        %v1040 = vadd.f32 %v927, %v1039
        %v1041 = vpop.f32.mrb[0].mxu0
        %v1042 = vadd.f32 %v929, %v1041
        %1043 = vdwg.mxu0
        %1044 = vmatprep.subr.bf16.mxu0 0
        %1045 = vmatpush1.bf16.msra.mxu0 %v676
        %1046 = vmatprep.subr.bf16.mxu0 0
        %1047 = vmatpush1.bf16.msra.mxu0 %v679
        %1048 = vmatprep.subr.bf16.mxu0 0
        %1049 = vmatpush1.bf16.msra.mxu0 %v682
        %1050 = vmatprep.subr.bf16.mxu0 0
        %1051 = vmatpush1.bf16.msra.mxu0 %v685
        %1052 = vmatprep.subr.bf16.mxu0 0
        %1053 = vmatpush1.bf16.msra.mxu0 %v688
        %1054 = vmatprep.subr.bf16.mxu0 0
        %1055 = vmatpush1.bf16.msra.mxu0 %v691
        %1056 = vmatprep.subr.bf16.mxu0 0
        %1057 = vmatpush1.bf16.msra.mxu0 %v694
        %1058 = vmatprep.subr.bf16.mxu0 0
        %1059 = vmatpush1.bf16.msra.mxu0 %v697
        %1060 = vmatprep.subr.bf16.mxu0 0
        %1061 = vmatpush1.bf16.msra.mxu0 %v700
        %1062 = vmatprep.subr.bf16.mxu0 0
        %1063 = vmatpush1.bf16.msra.mxu0 %v703
        %1064 = vmatprep.subr.bf16.mxu0 0
        %1065 = vmatpush1.bf16.msra.mxu0 %v706
        %1066 = vmatprep.subr.bf16.mxu0 0
        %1067 = vmatpush1.bf16.msra.mxu0 %v709
        %1068 = vmatprep.subr.bf16.mxu0 0
        %1069 = vmatpush1.bf16.msra.mxu0 %v712
        %1070 = vmatprep.subr.bf16.mxu0 0
        %1071 = vmatpush1.bf16.msra.mxu0 %v715
        %1072 = vmatprep.subr.bf16.mxu0 0
        %1073 = vmatpush1.bf16.msra.mxu0 %v718
        %1074 = vmatprep.subr.bf16.mxu0 0
        %1075 = vmatpush1.bf16.msra.mxu0 %v721
        %1076 = vmatprep.mubr.bf16.mxu0 %v387
        %1077 = vmatmul.mubr.bf16.gmra.mrb[0].mxu0 %v386
        %v1078 = vpop.f32.mrb[0].mxu0
        %v1079 = vadd.f32 0.0, %v1078
        %v1080 = vpop.f32.mrb[0].mxu0
        %v1081 = vpop.f32.mrb[0].mxu0
        %v1082 = vadd.f32 0.0, %v1081
        %v1083 = vpop.f32.mrb[0].mxu0
        %1084 = vmatprep.mubr.bf16.mxu0 %v390
        %1085 = vmatmul.mubr.bf16.gmra.mrb[0].mxu0 %v389
        %v1086 = vpop.f32.mrb[0].mxu0
        %v1087 = vadd.f32 0.0, %v1086
        %v1088 = vpop.f32.mrb[0].mxu0
        %v1089 = vpop.f32.mrb[0].mxu0
        %v1090 = vadd.f32 0.0, %v1089
        %v1091 = vpop.f32.mrb[0].mxu0
        %1092 = vmatprep.mubr.bf16.mxu0 %v393
        %1093 = vmatmul.mubr.bf16.gmra.mrb[0].mxu0 %v392
        %v1094 = vpop.f32.mrb[0].mxu0
        %v1095 = vadd.f32 0.0, %v1094
        %v1096 = vpop.f32.mrb[0].mxu0
        %v1097 = vpop.f32.mrb[0].mxu0
        %v1098 = vadd.f32 0.0, %v1097
        %v1099 = vpop.f32.mrb[0].mxu0
        %1100 = vmatprep.mubr.bf16.mxu0 %v396
        %1101 = vmatmul.mubr.bf16.gmra.mrb[0].mxu0 %v395
        %v1102 = vpop.f32.mrb[0].mxu0
        %v1103 = vadd.f32 0.0, %v1102
        %v1104 = vpop.f32.mrb[0].mxu0
        %v1105 = vpop.f32.mrb[0].mxu0
        %v1106 = vadd.f32 0.0, %v1105
        %v1107 = vpop.f32.mrb[0].mxu0
        %1108 = vmatprep.mubr.bf16.mxu0 %v399
        %1109 = vmatmul.mubr.bf16.gmra.mrb[0].mxu0 %v398
        %v1110 = vpop.f32.mrb[0].mxu0
        %v1111 = vadd.f32 0.0, %v1110
        %v1112 = vpop.f32.mrb[0].mxu0
        %v1113 = vpop.f32.mrb[0].mxu0
        %v1114 = vadd.f32 0.0, %v1113
        %v1115 = vpop.f32.mrb[0].mxu0
        %1116 = vmatprep.mubr.bf16.mxu0 %v402
        %1117 = vmatmul.mubr.bf16.gmra.mrb[0].mxu0 %v401
        %v1118 = vpop.f32.mrb[0].mxu0
        %v1119 = vadd.f32 0.0, %v1118
        %v1120 = vpop.f32.mrb[0].mxu0
        %v1121 = vpop.f32.mrb[0].mxu0
        %v1122 = vadd.f32 0.0, %v1121
        %v1123 = vpop.f32.mrb[0].mxu0
        %1124 = vmatprep.mubr.bf16.mxu0 %v405
        %1125 = vmatmul.mubr.bf16.gmra.mrb[0].mxu0 %v404
        %v1126 = vpop.f32.mrb[0].mxu0
        %v1127 = vadd.f32 0.0, %v1126
        %v1128 = vpop.f32.mrb[0].mxu0
        %v1129 = vpop.f32.mrb[0].mxu0
        %v1130 = vadd.f32 0.0, %v1129
        %v1131 = vpop.f32.mrb[0].mxu0
        %1132 = vmatprep.mubr.bf16.mxu0 %v408
        %1133 = vmatmul.mubr.bf16.gmra.mrb[0].mxu0 %v407
        %v1134 = vpop.f32.mrb[0].mxu0
        %v1135 = vadd.f32 0.0, %v1134
        %v1136 = vpop.f32.mrb[0].mxu0
        %v1137 = vpop.f32.mrb[0].mxu0
        %v1138 = vadd.f32 0.0, %v1137
        %v1139 = vpop.f32.mrb[0].mxu0
        %1140 = vdwg.mxu0
        %1141 = vmatprep.subr.bf16.mxu0 0
        %1142 = vmatpush1.bf16.msra.mxu0 %v724
        %1143 = vmatprep.subr.bf16.mxu0 0
        %1144 = vmatpush1.bf16.msra.mxu0 %v727
        %1145 = vmatprep.subr.bf16.mxu0 0
        %1146 = vmatpush1.bf16.msra.mxu0 %v730
        %1147 = vmatprep.subr.bf16.mxu0 0
        %1148 = vmatpush1.bf16.msra.mxu0 %v733
        %1149 = vmatprep.subr.bf16.mxu0 0
        %1150 = vmatpush1.bf16.msra.mxu0 %v736
        %1151 = vmatprep.subr.bf16.mxu0 0
        %1152 = vmatpush1.bf16.msra.mxu0 %v739
        %1153 = vmatprep.subr.bf16.mxu0 0
        %1154 = vmatpush1.bf16.msra.mxu0 %v742
        %1155 = vmatprep.subr.bf16.mxu0 0
        %1156 = vmatpush1.bf16.msra.mxu0 %v745
        %1157 = vmatprep.subr.bf16.mxu0 0
        %1158 = vmatpush1.bf16.msra.mxu0 0
        %1159 = vmatprep.subr.bf16.mxu0 0
        %1160 = vmatpush1.bf16.msra.mxu0 0
        %1161 = vmatprep.subr.bf16.mxu0 0
        %1162 = vmatpush1.bf16.msra.mxu0 0
        %1163 = vmatprep.subr.bf16.mxu0 0
        %1164 = vmatpush1.bf16.msra.mxu0 0
        %1165 = vmatprep.subr.bf16.mxu0 0
        %1166 = vmatpush1.bf16.msra.mxu0 0
        %1167 = vmatprep.subr.bf16.mxu0 0
        %1168 = vmatpush1.bf16.msra.mxu0 0
        %1169 = vmatprep.subr.bf16.mxu0 0
        %1170 = vmatpush1.bf16.msra.mxu0 0
        %1171 = vmatprep.subr.bf16.mxu0 0
        %1172 = vmatpush1.bf16.msra.mxu0 0
        %1173 = vmatprep.mubr.bf16.mxu0 0
        %1174 = vmatmul.mubr.bf16.gmra.mrb[0].mxu0 %v388
        %v1175 = vpop.f32.mrb[0].mxu0
        %v1176 = vadd.f32 %v1079, %v1175
        %v1177 = vpop.f32.mrb[0].mxu0
        %v1178 = vpop.f32.mrb[0].mxu0
        %v1179 = vadd.f32 %v1082, %v1178
        %v1180 = vpop.f32.mrb[0].mxu0
        %1181 = vmatprep.mubr.bf16.mxu0 0
        %1182 = vmatmul.mubr.bf16.gmra.mrb[0].mxu0 %v391
        %v1183 = vpop.f32.mrb[0].mxu0
        %v1184 = vadd.f32 %v1087, %v1183
        %v1185 = vpop.f32.mrb[0].mxu0
        %v1186 = vpop.f32.mrb[0].mxu0
        %v1187 = vadd.f32 %v1090, %v1186
        %v1188 = vpop.f32.mrb[0].mxu0
        %1189 = vmatprep.mubr.bf16.mxu0 0
        %1190 = vmatmul.mubr.bf16.gmra.mrb[0].mxu0 %v394
        %v1191 = vpop.f32.mrb[0].mxu0
        %v1192 = vadd.f32 %v1095, %v1191
        %v1193 = vpop.f32.mrb[0].mxu0
        %v1194 = vpop.f32.mrb[0].mxu0
        %v1195 = vadd.f32 %v1098, %v1194
        %v1196 = vpop.f32.mrb[0].mxu0
        %1197 = vmatprep.mubr.bf16.mxu0 0
        %1198 = vmatmul.mubr.bf16.gmra.mrb[0].mxu0 %v397
        %v1199 = vpop.f32.mrb[0].mxu0
        %v1200 = vadd.f32 %v1103, %v1199
        %v1201 = vpop.f32.mrb[0].mxu0
        %v1202 = vpop.f32.mrb[0].mxu0
        %v1203 = vadd.f32 %v1106, %v1202
        %v1204 = vpop.f32.mrb[0].mxu0
        %1205 = vmatprep.mubr.bf16.mxu0 0
        %1206 = vmatmul.mubr.bf16.gmra.mrb[0].mxu0 %v400
        %v1207 = vpop.f32.mrb[0].mxu0
        %v1208 = vadd.f32 %v1111, %v1207
        %v1209 = vpop.f32.mrb[0].mxu0
        %v1210 = vpop.f32.mrb[0].mxu0
        %v1211 = vadd.f32 %v1114, %v1210
        %v1212 = vpop.f32.mrb[0].mxu0
        %1213 = vmatprep.mubr.bf16.mxu0 0
        %1214 = vmatmul.mubr.bf16.gmra.mrb[0].mxu0 %v403
        %v1215 = vpop.f32.mrb[0].mxu0
        %v1216 = vadd.f32 %v1119, %v1215
        %v1217 = vpop.f32.mrb[0].mxu0
        %v1218 = vpop.f32.mrb[0].mxu0
        %v1219 = vadd.f32 %v1122, %v1218
        %v1220 = vpop.f32.mrb[0].mxu0
        %1221 = vmatprep.mubr.bf16.mxu0 0
        %1222 = vmatmul.mubr.bf16.gmra.mrb[0].mxu0 %v406
        %v1223 = vpop.f32.mrb[0].mxu0
        %v1224 = vadd.f32 %v1127, %v1223
        %v1225 = vpop.f32.mrb[0].mxu0
        %v1226 = vpop.f32.mrb[0].mxu0
        %v1227 = vadd.f32 %v1130, %v1226
        %v1228 = vpop.f32.mrb[0].mxu0
        %1229 = vmatprep.mubr.bf16.mxu0 0
        %1230 = vmatmul.mubr.bf16.gmra.mrb[0].mxu0 %v409
        %v1231 = vpop.f32.mrb[0].mxu0
        %v1232 = vadd.f32 %v1135, %v1231
        %v1233 = vpop.f32.mrb[0].mxu0
        %v1234 = vpop.f32.mrb[0].mxu0
        %v1235 = vadd.f32 %v1138, %v1234
        %v1236 = vpop.f32.mrb[0].mxu0
        %1237 = vdwg.mxu0
        %v1238 = vpack.c.bf16 %v970, %v966
        %v1239 = vpack.c.bf16 %v972, %v968
        %v1240 = vpack.c.bf16 %v1179, %v1176
        %v1241 = vpack.c.bf16 %v980, %v976
        %v1242 = vpack.c.bf16 %v982, %v978
        %v1243 = vpack.c.bf16 %v1187, %v1184
        %v1244 = vpack.c.bf16 %v990, %v986
        %v1245 = vpack.c.bf16 %v992, %v988
        %v1246 = vpack.c.bf16 %v1195, %v1192
        %v1247 = vpack.c.bf16 %v1000, %v996
        %v1248 = vpack.c.bf16 %v1002, %v998
        %v1249 = vpack.c.bf16 %v1203, %v1200
        %v1250 = vpack.c.bf16 %v1010, %v1006
        %v1251 = vpack.c.bf16 %v1012, %v1008
        %v1252 = vpack.c.bf16 %v1211, %v1208
        %v1253 = vpack.c.bf16 %v1020, %v1016
        %v1254 = vpack.c.bf16 %v1022, %v1018
        %v1255 = vpack.c.bf16 %v1219, %v1216
        %v1256 = vpack.c.bf16 %v1030, %v1026
        %v1257 = vpack.c.bf16 %v1032, %v1028
        %v1258 = vpack.c.bf16 %v1227, %v1224
        %v1259 = vpack.c.bf16 %v1040, %v1036
        %v1260 = vpack.c.bf16 %v1042, %v1038
        %v1261 = vpack.c.bf16 %v1235, %v1232
        %1262 = vmatprep.subr.bf16.mxu0 0
        %1263 = vmatpush1.bf16.xpose.msra.mxu0 %v1239
        %1264 = vmatprep.subr.bf16.mxu0 0
        %1265 = vmatpush1.bf16.xpose.msra.mxu0 %v1242
        %1266 = vmatprep.subr.bf16.mxu0 0
        %1267 = vmatpush1.bf16.xpose.msra.mxu0 %v1245
        %1268 = vmatprep.subr.bf16.mxu0 0
        %1269 = vmatpush1.bf16.xpose.msra.mxu0 %v1248
        %1270 = vmatprep.subr.bf16.mxu0 0
        %1271 = vmatpush1.bf16.xpose.msra.mxu0 %v1251
        %1272 = vmatprep.subr.bf16.mxu0 0
        %1273 = vmatpush1.bf16.xpose.msra.mxu0 %v1254
        %1274 = vmatprep.subr.bf16.mxu0 0
        %1275 = vmatpush1.bf16.xpose.msra.mxu0 %v1257
        %1276 = vmatprep.subr.bf16.mxu0 0
        %1277 = vmatpush1.bf16.xpose.msra.mxu0 %v1260
        %1278 = vmatprep.subr.bf16.mxu0 0
        %1279 = vmatpush1.bf16.xpose.msra.mxu0 0
        %1280 = vmatprep.subr.bf16.mxu0 0
        %1281 = vmatpush1.bf16.xpose.msra.mxu0 0
        %1282 = vmatprep.subr.bf16.mxu0 0
        %1283 = vmatpush1.bf16.xpose.msra.mxu0 0
        %1284 = vmatprep.subr.bf16.mxu0 0
        %1285 = vmatpush1.bf16.xpose.msra.mxu0 0
        %1286 = vmatprep.subr.bf16.mxu0 0
        %1287 = vmatpush1.bf16.xpose.msra.mxu0 0
        %1288 = vmatprep.subr.bf16.mxu0 0
        %1289 = vmatpush1.bf16.xpose.msra.mxu0 0
        %1290 = vmatprep.subr.bf16.mxu0 0
        %1291 = vmatpush1.bf16.xpose.msra.mxu0 0
        %1292 = vmatprep.subr.bf16.mxu0 0
        %1293 = vmatpush1.bf16.xpose.msra.mxu0 0
        %1294 = vmatprep.mubr.bf16.mxu0 0
        %1295 = vmatmul.mubr.bf16.gmra.mrb[0].mxu0 %v1238
        %v1296 = vpop.f32.mrb[0].mxu0
        %v1297 = vadd.f32 0.0, %v1296
        %v1298 = vpop.f32.mrb[0].mxu0
        %v1299 = vpop.f32.mrb[0].mxu0
        %v1300 = vadd.f32 0.0, %v1299
        %v1301 = vpop.f32.mrb[0].mxu0
        %1302 = vmatprep.mubr.bf16.mxu0 0
        %1303 = vmatmul.mubr.bf16.gmra.mrb[0].mxu0 %v1241
        %v1304 = vpop.f32.mrb[0].mxu0
        %v1305 = vadd.f32 0.0, %v1304
        %v1306 = vpop.f32.mrb[0].mxu0
        %v1307 = vpop.f32.mrb[0].mxu0
        %v1308 = vadd.f32 0.0, %v1307
        %v1309 = vpop.f32.mrb[0].mxu0
        %1310 = vmatprep.mubr.bf16.mxu0 0
        %1311 = vmatmul.mubr.bf16.gmra.mrb[0].mxu0 %v1244
        %v1312 = vpop.f32.mrb[0].mxu0
        %v1313 = vadd.f32 0.0, %v1312
        %v1314 = vpop.f32.mrb[0].mxu0
        %v1315 = vpop.f32.mrb[0].mxu0
        %v1316 = vadd.f32 0.0, %v1315
        %v1317 = vpop.f32.mrb[0].mxu0
        %1318 = vmatprep.mubr.bf16.mxu0 0
        %1319 = vmatmul.mubr.bf16.gmra.mrb[0].mxu0 %v1247
        %v1320 = vpop.f32.mrb[0].mxu0
        %v1321 = vadd.f32 0.0, %v1320
        %v1322 = vpop.f32.mrb[0].mxu0
        %v1323 = vpop.f32.mrb[0].mxu0
        %v1324 = vadd.f32 0.0, %v1323
        %v1325 = vpop.f32.mrb[0].mxu0
        %1326 = vmatprep.mubr.bf16.mxu0 0
        %1327 = vmatmul.mubr.bf16.gmra.mrb[0].mxu0 %v1250
        %v1328 = vpop.f32.mrb[0].mxu0
        %v1329 = vadd.f32 0.0, %v1328
        %v1330 = vpop.f32.mrb[0].mxu0
        %v1331 = vpop.f32.mrb[0].mxu0
        %v1332 = vadd.f32 0.0, %v1331
        %v1333 = vpop.f32.mrb[0].mxu0
        %1334 = vmatprep.mubr.bf16.mxu0 0
        %1335 = vmatmul.mubr.bf16.gmra.mrb[0].mxu0 %v1253
        %v1336 = vpop.f32.mrb[0].mxu0
        %v1337 = vadd.f32 0.0, %v1336
        %v1338 = vpop.f32.mrb[0].mxu0
        %v1339 = vpop.f32.mrb[0].mxu0
        %v1340 = vadd.f32 0.0, %v1339
        %v1341 = vpop.f32.mrb[0].mxu0
        %1342 = vmatprep.mubr.bf16.mxu0 0
        %1343 = vmatmul.mubr.bf16.gmra.mrb[0].mxu0 %v1256
        %v1344 = vpop.f32.mrb[0].mxu0
        %v1345 = vadd.f32 0.0, %v1344
        %v1346 = vpop.f32.mrb[0].mxu0
        %v1347 = vpop.f32.mrb[0].mxu0
        %v1348 = vadd.f32 0.0, %v1347
        %v1349 = vpop.f32.mrb[0].mxu0
        %1350 = vmatprep.mubr.bf16.mxu0 0
        %1351 = vmatmul.mubr.bf16.gmra.mrb[0].mxu0 %v1259
        %v1352 = vpop.f32.mrb[0].mxu0
        %v1353 = vadd.f32 0.0, %v1352
        %v1354 = vpop.f32.mrb[0].mxu0
        %v1355 = vpop.f32.mrb[0].mxu0
        %v1356 = vadd.f32 0.0, %v1355
        %v1357 = vpop.f32.mrb[0].mxu0
        %1358 = vdwg.mxu0
        %v1359 = vlaneseq
        %v1360 = vshrl.u32 %v1359, 7
        %v1361 = vadd.s32 %v1360, 8
        %v1362 = vadd.s32 %v1360, 16
        %v1363 = vadd.s32 %v1360, 24
        %v1364 = vadd.s32 %v1360, 32
        %v1365 = vadd.s32 %v1360, 40
        %v1366 = vadd.s32 %v1360, 48
        %v1367 = vadd.s32 %v1360, 56
        %v1368 = vadd.s32 %v1360, 64
        %v1369 = vadd.s32 %v1360, 72
        %v1370 = vadd.s32 %v1360, 80
        %v1371 = vadd.s32 %v1360, 88
        %v1372 = vadd.s32 %v1360, 96
        %v1373 = vadd.s32 %v1360, 104
        %v1374 = vadd.s32 %v1360, 112
        %v1375 = vadd.s32 %v1360, 120
        %v1376 = vlaneseq
        %v1377 = vand.u32 %v1376, 127
        %vm1378 = vcmp.le.s32.totalorder %v1377, %v1360
        %vm1379 = vcmp.le.s32.totalorder %v1377, %v1361
        %vm1380 = vcmp.le.s32.totalorder %v1377, %v1362
        %vm1381 = vcmp.le.s32.totalorder %v1377, %v1363
        %vm1382 = vcmp.le.s32.totalorder %v1377, %v1364
        %vm1383 = vcmp.le.s32.totalorder %v1377, %v1365
        %vm1384 = vcmp.le.s32.totalorder %v1377, %v1366
        %vm1385 = vcmp.le.s32.totalorder %v1377, %v1367
        %vm1386 = vcmp.le.s32.totalorder %v1377, %v1368
        %vm1387 = vcmp.le.s32.totalorder %v1377, %v1369
        %vm1388 = vcmp.le.s32.totalorder %v1377, %v1370
        %vm1389 = vcmp.le.s32.totalorder %v1377, %v1371
        %vm1390 = vcmp.le.s32.totalorder %v1377, %v1372
        %vm1391 = vcmp.le.s32.totalorder %v1377, %v1373
        %vm1392 = vcmp.le.s32.totalorder %v1377, %v1374
        %vm1393 = vcmp.le.s32.totalorder %v1377, %v1375
        %v1394 = vsel %vm1378, %v1297, -inf
        %v1395 = vsel %vm1379, %v1300, -inf
        %v1396 = vsel %vm1380, %v1305, -inf
        %v1397 = vsel %vm1381, %v1308, -inf
        %v1398 = vsel %vm1382, %v1313, -inf
        %v1399 = vsel %vm1383, %v1316, -inf
        %v1400 = vsel %vm1384, %v1321, -inf
        %v1401 = vsel %vm1385, %v1324, -inf
        %v1402 = vsel %vm1386, %v1329, -inf
        %v1403 = vsel %vm1387, %v1332, -inf
        %v1404 = vsel %vm1388, %v1337, -inf
        %v1405 = vsel %vm1389, %v1340, -inf
        %v1406 = vsel %vm1390, %v1345, -inf
        %v1407 = vsel %vm1391, %v1348, -inf
        %v1408 = vsel %vm1392, %v1353, -inf
        %v1409 = vsel %vm1393, %v1356, -inf
        %1410 = vmax.xlane.f32.xlu0 %v1394
        %v1411 = vpop.xlane.xlu0 %1410
        %1412 = vmax.xlane.f32.xlu0 %v1395
        %v1413 = vpop.xlane.xlu0 %1412
        %1414 = vmax.xlane.f32.xlu0 %v1396
        %v1415 = vpop.xlane.xlu0 %1414
        %1416 = vmax.xlane.f32.xlu0 %v1397
        %v1417 = vpop.xlane.xlu0 %1416
        %1418 = vmax.xlane.f32.xlu0 %v1398
        %v1419 = vpop.xlane.xlu0 %1418
        %1420 = vmax.xlane.f32.xlu0 %v1399
        %v1421 = vpop.xlane.xlu0 %1420
        %1422 = vmax.xlane.f32.xlu0 %v1400
        %v1423 = vpop.xlane.xlu0 %1422
        %1424 = vmax.xlane.f32.xlu0 %v1401
        %v1425 = vpop.xlane.xlu0 %1424
        %1426 = vmax.xlane.f32.xlu0 %v1402
        %v1427 = vpop.xlane.xlu0 %1426
        %1428 = vmax.xlane.f32.xlu0 %v1403
        %v1429 = vpop.xlane.xlu0 %1428
        %1430 = vmax.xlane.f32.xlu0 %v1404
        %v1431 = vpop.xlane.xlu0 %1430
        %1432 = vmax.xlane.f32.xlu0 %v1405
        %v1433 = vpop.xlane.xlu0 %1432
        %1434 = vmax.xlane.f32.xlu0 %v1406
        %v1435 = vpop.xlane.xlu0 %1434
        %1436 = vmax.xlane.f32.xlu0 %v1407
        %v1437 = vpop.xlane.xlu0 %1436
        %1438 = vmax.xlane.f32.xlu0 %v1408
        %v1439 = vpop.xlane.xlu0 %1438
        %1440 = vmax.xlane.f32.xlu0 %v1409
        %v1441 = vpop.xlane.xlu0 %1440
        %v1442 = vsub.f32 %v1394, %v1411
        %v1443 = vsub.f32 %v1395, %v1413
        %v1444 = vsub.f32 %v1396, %v1415
        %v1445 = vsub.f32 %v1397, %v1417
        %v1446 = vsub.f32 %v1398, %v1419
        %v1447 = vsub.f32 %v1399, %v1421
        %v1448 = vsub.f32 %v1400, %v1423
        %v1449 = vsub.f32 %v1401, %v1425
        %v1450 = vsub.f32 %v1402, %v1427
        %v1451 = vsub.f32 %v1403, %v1429
        %v1452 = vsub.f32 %v1404, %v1431
        %v1453 = vsub.f32 %v1405, %v1433
        %v1454 = vsub.f32 %v1406, %v1435
        %v1455 = vsub.f32 %v1407, %v1437
        %v1456 = vsub.f32 %v1408, %v1439
        %v1457 = vsub.f32 %v1409, %v1441
        %v1458 = vmul.f32 %v1442, 1.442695
        %v1459 = vpow.pop %v1458
        %v1460 = vmul.f32 %v1443, 1.442695
        %v1461 = vpow.pop %v1460
        %v1462 = vmul.f32 %v1444, 1.442695
        %v1463 = vpow.pop %v1462
        %v1464 = vmul.f32 %v1445, 1.442695
        %v1465 = vpow.pop %v1464
        %v1466 = vmul.f32 %v1446, 1.442695
        %v1467 = vpow.pop %v1466
        %v1468 = vmul.f32 %v1447, 1.442695
        %v1469 = vpow.pop %v1468
        %v1470 = vmul.f32 %v1448, 1.442695
        %v1471 = vpow.pop %v1470
        %v1472 = vmul.f32 %v1449, 1.442695
        %v1473 = vpow.pop %v1472
        %v1474 = vmul.f32 %v1450, 1.442695
        %v1475 = vpow.pop %v1474
        %v1476 = vmul.f32 %v1451, 1.442695
        %v1477 = vpow.pop %v1476
        %v1478 = vmul.f32 %v1452, 1.442695
        %v1479 = vpow.pop %v1478
        %v1480 = vmul.f32 %v1453, 1.442695
        %v1481 = vpow.pop %v1480
        %v1482 = vmul.f32 %v1454, 1.442695
        %v1483 = vpow.pop %v1482
        %v1484 = vmul.f32 %v1455, 1.442695
        %v1485 = vpow.pop %v1484
        %v1486 = vmul.f32 %v1456, 1.442695
        %v1487 = vpow.pop %v1486
        %v1488 = vmul.f32 %v1457, 1.442695
        %v1489 = vpow.pop %v1488
        %1490 = vadd.xlane.f32.xlu0 %v1459
        %v1491 = vpop.xlane.xlu0 %1490
        %1492 = vadd.xlane.f32.xlu0 %v1461
        %v1493 = vpop.xlane.xlu0 %1492
        %1494 = vadd.xlane.f32.xlu0 %v1463
        %v1495 = vpop.xlane.xlu0 %1494
        %1496 = vadd.xlane.f32.xlu0 %v1465
        %v1497 = vpop.xlane.xlu0 %1496
        %1498 = vadd.xlane.f32.xlu0 %v1467
        %v1499 = vpop.xlane.xlu0 %1498
        %1500 = vadd.xlane.f32.xlu0 %v1469
        %v1501 = vpop.xlane.xlu0 %1500
        %1502 = vadd.xlane.f32.xlu0 %v1471
        %v1503 = vpop.xlane.xlu0 %1502
        %1504 = vadd.xlane.f32.xlu0 %v1473
        %v1505 = vpop.xlane.xlu0 %1504
        %1506 = vadd.xlane.f32.xlu0 %v1475
        %v1507 = vpop.xlane.xlu0 %1506
        %1508 = vadd.xlane.f32.xlu0 %v1477
        %v1509 = vpop.xlane.xlu0 %1508
        %1510 = vadd.xlane.f32.xlu0 %v1479
        %v1511 = vpop.xlane.xlu0 %1510
        %1512 = vadd.xlane.f32.xlu0 %v1481
        %v1513 = vpop.xlane.xlu0 %1512
        %1514 = vadd.xlane.f32.xlu0 %v1483
        %v1515 = vpop.xlane.xlu0 %1514
        %1516 = vadd.xlane.f32.xlu0 %v1485
        %v1517 = vpop.xlane.xlu0 %1516
        %1518 = vadd.xlane.f32.xlu0 %v1487
        %v1519 = vpop.xlane.xlu0 %1518
        %1520 = vadd.xlane.f32.xlu0 %v1489
        %v1521 = vpop.xlane.xlu0 %1520
        %v1522 = vrcp.pop %v1491
        %v1523 = vrcp.pop %v1493
        %v1524 = vrcp.pop %v1495
        %v1525 = vrcp.pop %v1497
        %v1526 = vrcp.pop %v1499
        %v1527 = vrcp.pop %v1501
        %v1528 = vrcp.pop %v1503
        %v1529 = vrcp.pop %v1505
        %v1530 = vrcp.pop %v1507
        %v1531 = vrcp.pop %v1509
        %v1532 = vrcp.pop %v1511
        %v1533 = vrcp.pop %v1513
        %v1534 = vrcp.pop %v1515
        %v1535 = vrcp.pop %v1517
        %v1536 = vrcp.pop %v1519
        %v1537 = vrcp.pop %v1521
        %v1538 = vmul.f32 %v1459, %v1522
        %v1539 = vmul.f32 %v1461, %v1523
        %v1540 = vmul.f32 %v1463, %v1524
        %v1541 = vmul.f32 %v1465, %v1525
        %v1542 = vmul.f32 %v1467, %v1526
        %v1543 = vmul.f32 %v1469, %v1527
        %v1544 = vmul.f32 %v1471, %v1528
        %v1545 = vmul.f32 %v1473, %v1529
        %v1546 = vmul.f32 %v1475, %v1530
        %v1547 = vmul.f32 %v1477, %v1531
        %v1548 = vmul.f32 %v1479, %v1532
        %v1549 = vmul.f32 %v1481, %v1533
        %v1550 = vmul.f32 %v1483, %v1534
        %v1551 = vmul.f32 %v1485, %v1535
        %v1552 = vmul.f32 %v1487, %v1536
        %v1553 = vmul.f32 %v1489, %v1537
        %v1554 = vpack.c.bf16 %v1539, %v1538
        %v1555 = vpack.c.bf16 %v1541, %v1540
        %v1556 = vpack.c.bf16 %v1543, %v1542
        %v1557 = vpack.c.bf16 %v1545, %v1544
        %v1558 = vpack.c.bf16 %v1547, %v1546
        %v1559 = vpack.c.bf16 %v1549, %v1548
        %v1560 = vpack.c.bf16 %v1551, %v1550
        %v1561 = vpack.c.bf16 %v1553, %v1552
        %1562 = vmatprep.subr.bf16.mxu0 0
        %1563 = vmatpush1.bf16.msra.mxu0 %v1240
        %1564 = vmatprep.subr.bf16.mxu0 0
        %1565 = vmatpush1.bf16.msra.mxu0 %v1243
        %1566 = vmatprep.subr.bf16.mxu0 0
        %1567 = vmatpush1.bf16.msra.mxu0 %v1246
        %1568 = vmatprep.subr.bf16.mxu0 0
        %1569 = vmatpush1.bf16.msra.mxu0 %v1249
        %1570 = vmatprep.subr.bf16.mxu0 0
        %1571 = vmatpush1.bf16.msra.mxu0 %v1252
        %1572 = vmatprep.subr.bf16.mxu0 0
        %1573 = vmatpush1.bf16.msra.mxu0 %v1255
        %1574 = vmatprep.subr.bf16.mxu0 0
        %1575 = vmatpush1.bf16.msra.mxu0 %v1258
        %1576 = vmatprep.subr.bf16.mxu0 0
        %1577 = vmatpush1.bf16.msra.mxu0 %v1261
        %1578 = vmatprep.subr.bf16.mxu0 0
        %1579 = vmatpush1.bf16.msra.mxu0 0
        %1580 = vmatprep.subr.bf16.mxu0 0
        %1581 = vmatpush1.bf16.msra.mxu0 0
        %1582 = vmatprep.subr.bf16.mxu0 0
        %1583 = vmatpush1.bf16.msra.mxu0 0
        %1584 = vmatprep.subr.bf16.mxu0 0
        %1585 = vmatpush1.bf16.msra.mxu0 0
        %1586 = vmatprep.subr.bf16.mxu0 0
        %1587 = vmatpush1.bf16.msra.mxu0 0
        %1588 = vmatprep.subr.bf16.mxu0 0
        %1589 = vmatpush1.bf16.msra.mxu0 0
        %1590 = vmatprep.subr.bf16.mxu0 0
        %1591 = vmatpush1.bf16.msra.mxu0 0
        %1592 = vmatprep.subr.bf16.mxu0 0
        %1593 = vmatpush1.bf16.msra.mxu0 0
        %1594 = vmatprep.mubr.bf16.mxu0 0
        %1595 = vmatmul.mubr.bf16.gmra.mrb[0].mxu0 %v1554
        %v1596 = vpop.f32.mrb[0].mxu0
        %v1597 = vadd.f32 0.0, %v1596
        %v1598 = vpop.f32.mrb[0].mxu0
        %v1599 = vpop.f32.mrb[0].mxu0
        %v1600 = vadd.f32 0.0, %v1599
        %v1601 = vpop.f32.mrb[0].mxu0
        %1602 = vmatprep.mubr.bf16.mxu0 0
        %1603 = vmatmul.mubr.bf16.gmra.mrb[0].mxu0 %v1555
        %v1604 = vpop.f32.mrb[0].mxu0
        %v1605 = vadd.f32 0.0, %v1604
        %v1606 = vpop.f32.mrb[0].mxu0
        %v1607 = vpop.f32.mrb[0].mxu0
        %v1608 = vadd.f32 0.0, %v1607
        %v1609 = vpop.f32.mrb[0].mxu0
        %1610 = vmatprep.mubr.bf16.mxu0 0
        %1611 = vmatmul.mubr.bf16.gmra.mrb[0].mxu0 %v1556
        %v1612 = vpop.f32.mrb[0].mxu0
        %v1613 = vadd.f32 0.0, %v1612
        %v1614 = vpop.f32.mrb[0].mxu0
        %v1615 = vpop.f32.mrb[0].mxu0
        %v1616 = vadd.f32 0.0, %v1615
        %v1617 = vpop.f32.mrb[0].mxu0
        %1618 = vmatprep.mubr.bf16.mxu0 0
        %1619 = vmatmul.mubr.bf16.gmra.mrb[0].mxu0 %v1557
        %v1620 = vpop.f32.mrb[0].mxu0
        %v1621 = vadd.f32 0.0, %v1620
        %v1622 = vpop.f32.mrb[0].mxu0
        %v1623 = vpop.f32.mrb[0].mxu0
        %v1624 = vadd.f32 0.0, %v1623
        %v1625 = vpop.f32.mrb[0].mxu0
        %1626 = vmatprep.mubr.bf16.mxu0 0
        %1627 = vmatmul.mubr.bf16.gmra.mrb[0].mxu0 %v1558
        %v1628 = vpop.f32.mrb[0].mxu0
        %v1629 = vadd.f32 0.0, %v1628
        %v1630 = vpop.f32.mrb[0].mxu0
        %v1631 = vpop.f32.mrb[0].mxu0
        %v1632 = vadd.f32 0.0, %v1631
        %v1633 = vpop.f32.mrb[0].mxu0
        %1634 = vmatprep.mubr.bf16.mxu0 0
        %1635 = vmatmul.mubr.bf16.gmra.mrb[0].mxu0 %v1559
        %v1636 = vpop.f32.mrb[0].mxu0
        %v1637 = vadd.f32 0.0, %v1636
        %v1638 = vpop.f32.mrb[0].mxu0
        %v1639 = vpop.f32.mrb[0].mxu0
        %v1640 = vadd.f32 0.0, %v1639
        %v1641 = vpop.f32.mrb[0].mxu0
        %1642 = vmatprep.mubr.bf16.mxu0 0
        %1643 = vmatmul.mubr.bf16.gmra.mrb[0].mxu0 %v1560
        %v1644 = vpop.f32.mrb[0].mxu0
        %v1645 = vadd.f32 0.0, %v1644
        %v1646 = vpop.f32.mrb[0].mxu0
        %v1647 = vpop.f32.mrb[0].mxu0
        %v1648 = vadd.f32 0.0, %v1647
        %v1649 = vpop.f32.mrb[0].mxu0
        %1650 = vmatprep.mubr.bf16.mxu0 0
        %1651 = vmatmul.mubr.bf16.gmra.mrb[0].mxu0 %v1561
        %v1652 = vpop.f32.mrb[0].mxu0
        %v1653 = vadd.f32 0.0, %v1652
        %v1654 = vpop.f32.mrb[0].mxu0
        %v1655 = vpop.f32.mrb[0].mxu0
        %v1656 = vadd.f32 0.0, %v1655
        %v1657 = vpop.f32.mrb[0].mxu0
        %1658 = vdwg.mxu0
        %1659 = vst [vmem:[%s176] sm:$0xff] %v1597
        %1660 = vst [vmem:[%s176 + $0x8] sm:$0xff] %v1600
        %1661 = vst [vmem:[%s176 + $0x10] sm:$0xff] %v1605
        %1662 = vst [vmem:[%s176 + $0x18] sm:$0xff] %v1608
        %1663 = vst [vmem:[%s176 + $0x20] sm:$0xff] %v1613
        %1664 = vst [vmem:[%s176 + $0x28] sm:$0xff] %v1616
        %1665 = vst [vmem:[%s176 + $0x30] sm:$0xff] %v1621
        %1666 = vst [vmem:[%s176 + $0x38] sm:$0xff] %v1624
        %1667 = vst [vmem:[%s176 + $0x40] sm:$0xff] %v1629
        %1668 = vst [vmem:[%s176 + $0x48] sm:$0xff] %v1632
        %1669 = vst [vmem:[%s176 + $0x50] sm:$0xff] %v1637
        %1670 = vst [vmem:[%s176 + $0x58] sm:$0xff] %v1640
        %1671 = vst [vmem:[%s176 + $0x60] sm:$0xff] %v1645
        %1672 = vst [vmem:[%s176 + $0x68] sm:$0xff] %v1648
        %1673 = vst [vmem:[%s176 + $0x70] sm:$0xff] %v1653
        %1674 = vst [vmem:[%s176 + $0x78] sm:$0xff] %v1656
        %s1675 = sand.u32 %s75, 1
        %s1676 = scalar_lea.sflag [#allocation4], %s1675
        %s1677 = sand.u32 %s75, 1
        %s1678 = smul.addr %s1677, 128
        %s1679 = scalar_lea.vmem [#allocation7], %s1678
        // Predicated region
        $region37: #{tpu_custom_call.1} parent=27 // pred_check
          %p1680 = pneg %p85
        $region38: #{tpu_custom_call.1} parent=27 // pred_check_branch
          %1682 = sbr.rel (%p1680) target = $region40
        $region39: #{tpu_custom_call.1} parent=27 // pred_region
          %s1684 = ssub.s32 2048, 2048
          %1685 = vsyncadd %s1676, %s1684
          %s1686 = smul.addr %s20, 16
          %s1687 = smul.addr %s1686, 128
          %s1688 = scalar_lea.hbm %s2, %s1687
          %s1689 = sshll.u32 %s1679, 4
          %s1690 = int_to_ptr.vmem [resolvable:$true] %s1689
          %1695 = dma.vmem_to_hbm [thread:$0]  %s1690, 2048, %s1688, %s1676, 128, 128, 8
        $region40: #{tpu_custom_call.1} parent=27 // pred_fallthru
          _
      $region28: #{tpu_custom_call.1} parent=5 // pred_fallthru
        _
      %p1696 = scmp.le.s32.totalorder 2, %s15
      // Predicated region
      $region41: #{tpu_custom_call.1} parent=5 // pred_check
        %p1697 = pneg %p1696
      $region42: #{tpu_custom_call.1} parent=5 // pred_check_branch
        %1699 = sbr.rel (%p1697) target = $region44
      $region43: #{tpu_custom_call.1} parent=5 // pred_region
        %s1700 = ssub.s32 %s15, 2
        // Predicated region
        $region45: #{tpu_custom_call.1} parent=43 // pred_check
          %p1701 = pneg %p91
        $region46: #{tpu_custom_call.1} parent=43 // pred_check_branch
          %1703 = sbr.rel (%p1701) target = $region48
        $region47: #{tpu_custom_call.1} parent=43 // pred_region
          %s1704 = sand.u32 %s76, 1
          %s1705 = scalar_lea.sflag [#allocation4], %s1704
          %s1706 = sand.u32 %s76, 1
          %s1707 = smul.addr %s1706, 128
          %s1708 = scalar_lea.vmem [#allocation7], %s1707
          %1709 = dma.done %s1705, 2048
        $region48: #{tpu_custom_call.1} parent=43 // pred_fallthru
          _
      $region44: #{tpu_custom_call.1} parent=5 // pred_fallthru
        _
    $region6: #{tpu_custom_call.1} parent=1 // loop_footer
      %s19 = sadd.s32 1, %s15
    $region7: #{tpu_custom_call.1} parent=1 // loop_footer_branch
      %14 = sbr.rel target = $region3
    $region8: #{tpu_custom_call.1} parent=1 // loop_exit
      _
    %1710 = vsyncpa [#allocation3], 1
    %s1711 = scalar_lea.sflag [#allocation3], 1
    %1712 = vsyncpa %s1711, 1
    %1713 = vsyncpa [#allocation6], 1
    %1714 = vsyncpa [#allocation4], 1
    %s1715 = scalar_lea.sflag [#allocation4], 1
    %1716 = vsyncpa %s1715, 1

</llo_original>
